<compile_context>
chip_gen: v6e
topology: v6e:2x2x1
jax: 0.10.0
libtpu: 0.0.40
codegen_flags: <defaults>
</compile_context>

<pallas_src>
import math
import random

import numpy as np
import jax
import jax.numpy as jnp
from jax import lax
from jax.experimental import pallas as pl
from jax.experimental.pallas import tpu as pltpu


def _round_up(x, m):
    return -(-x // m) * m


# ------------------------------------------------------------------------- #
# Dense fused kernel: out = [ (W_u*inv) @ E  stacked over  W_v @ E ], the
# second (self) half scaled by eps in-kernel.  One stacked MXU matmul.
# ------------------------------------------------------------------------- #
def mean_aggregator_dense(eps, w_u_scaled, w_v, embed_matrix, *,
                          tm=128, tk=512, tn=512,
                          compute_dtype=jnp.float32,
                          resident_budget_bytes=24 * 1024 * 1024):
    w_u_scaled = np.asarray(w_u_scaled)
    w_v = np.asarray(w_v)
    B, N = w_u_scaled.shape
    N2, D = embed_matrix.shape
    assert N2 == N

    itemsize = np.dtype(compute_dtype).itemsize
    b_pad = _round_up(B, tm)          # each stacked half is tile aligned
    rows = 2 * b_pad
    m_tiles = rows // tm
    assert b_pad % tm == 0            # invariant for the u/v-half test below

    eps_arr = jnp.asarray(eps, jnp.float32).reshape(1)
    n_pad128 = _round_up(N, 128)

    # Resident-E VMEM footprint: E (single copy) + 2x W tile + 2x out tile.
    resident_bytes = (n_pad128 * D * itemsize
                      + 2 * tm * n_pad128 * itemsize
                      + 2 * tm * D * 4)
    use_resident = resident_bytes <= resident_budget_bytes

    if use_resident:
        # --------- variant 1: E fully resident in VMEM, grid over M only ----
        n_pad = n_pad128
        w_stacked = jnp.zeros((rows, n_pad), compute_dtype)
        w_stacked = w_stacked.at[:B, :N].set(jnp.asarray(w_u_scaled, compute_dtype))
        w_stacked = w_stacked.at[b_pad:b_pad + B, :N].set(jnp.asarray(w_v, compute_dtype))
        e_pad = jnp.zeros((n_pad, D), compute_dtype)
        e_pad = e_pad.at[:N, :].set(jnp.asarray(embed_matrix, compute_dtype))

        def kernel(eps_ref, w_ref, e_ref, out_ref):
            m = pl.program_id(0)                                  # top level only
            scale = jnp.where((m * tm) >= b_pad, eps_ref[0], jnp.float32(1.0))
            out_ref[...] = (scale * jnp.dot(
                w_ref[...], e_ref[...],
                preferred_element_type=jnp.float32,
                precision=jax.lax.Precision.HIGHEST)).astype(out_ref.dtype)

        flops = 2 * rows * n_pad * D
        bytes_accessed = (rows * n_pad * itemsize + n_pad * D * itemsize
                          + rows * D * 4)
        vmem_limit = int(min(48 * 1024 * 1024,
                             resident_bytes + 4 * 1024 * 1024))

        out = pl.pallas_call(
            kernel,
            out_shape=jax.ShapeDtypeStruct((rows, D), jnp.float32),
            grid_spec=pltpu.PrefetchScalarGridSpec(
                num_scalar_prefetch=0,
                grid=(m_tiles,),
                in_specs=[
                    pl.BlockSpec(memory_space=pltpu.MemorySpace.SMEM),  # eps (1,)
                    pl.BlockSpec((tm, n_pad), lambda m: (m, 0)),        # W tile
                    pl.BlockSpec(memory_space=pltpu.MemorySpace.VMEM),  # E resident
                ],
                out_specs=pl.BlockSpec((tm, D), lambda m: (m, 0)),      # lane dense
            ),
            compiler_params=pltpu.CompilerParams(
                dimension_semantics=("parallel",),
                vmem_limit_bytes=vmem_limit,
            ),
            cost_estimate=pl.CostEstimate(flops=int(flops), transcendentals=0,
                                          bytes_accessed=int(bytes_accessed)),
        )(eps_arr, w_stacked, e_pad)

    else:
        # --------- variant 2: streaming, (M, D, K) tiled with accumulator ---
        tk_eff = _round_up(min(tk, n_pad128), 128)
        n_pad = _round_up(N, tk_eff)
        d_pad128 = _round_up(D, 128)
        tn_eff = _round_up(min(tn, d_pad128), 128)
        d_pad = _round_up(D, tn_eff)
        k_tiles = n_pad // tk_eff
        d_tiles = d_pad // tn_eff

        w_stacked = jnp.zeros((rows, n_pad), compute_dtype)
        w_stacked = w_stacked.at[:B, :N].set(jnp.asarray(w_u_scaled, compute_dtype))
        w_stacked = w_stacked.at[b_pad:b_pad + B, :N].set(jnp.asarray(w_v, compute_dtype))
        e_pad = jnp.zeros((n_pad, d_pad), compute_dtype)
        e_pad = e_pad.at[:N, :D].set(jnp.asarray(embed_matrix, compute_dtype))

        def kernel(eps_ref, w_ref, e_ref, out_ref, acc_ref):
            # program_id / eps scale hoisted out of pl.when bodies.
            m = pl.program_id(0)
            k = pl.program_id(2)
            scale = jnp.where((m * tm) >= b_pad, eps_ref[0], jnp.float32(1.0))

            @pl.when(k == 0)
            def _init():
                acc_ref[...] = jnp.zeros_like(acc_ref)

            acc_ref[...] += jnp.dot(w_ref[...], e_ref[...],
                                    preferred_element_type=jnp.float32,
                                    precision=jax.lax.Precision.HIGHEST)

            @pl.when(k == k_tiles - 1)
            def _finalize():
                out_ref[...] = (acc_ref[...] * scale).astype(out_ref.dtype)

        flops = 2 * rows * n_pad * d_pad
        # Advisory cost reflects actual traffic: E re-streamed per M tile,
        # W re-streamed per D tile.
        bytes_accessed = (d_tiles * rows * n_pad * itemsize
                          + m_tiles * n_pad * d_pad * itemsize
                          + rows * d_pad * 4)
        tile_bytes = (2 * tm * tk_eff * itemsize + 2 * tk_eff * tn_eff * itemsize
                      + 2 * tm * tn_eff * 4 + tm * tn_eff * 4)
        vmem_limit = int(min(48 * 1024 * 1024,
                             max(tile_bytes + 4 * 1024 * 1024, 8 * 1024 * 1024)))

        out = pl.pallas_call(
            kernel,
            out_shape=jax.ShapeDtypeStruct((rows, d_pad), jnp.float32),
            grid_spec=pltpu.PrefetchScalarGridSpec(
                num_scalar_prefetch=0,
                grid=(m_tiles, d_tiles, k_tiles),
                in_specs=[
                    pl.BlockSpec(memory_space=pltpu.MemorySpace.SMEM),       # eps
                    pl.BlockSpec((tm, tk_eff), lambda m, n, k: (m, k)),      # W
                    pl.BlockSpec((tk_eff, tn_eff), lambda m, n, k: (k, n)),  # E
                ],
                out_specs=pl.BlockSpec((tm, tn_eff), lambda m, n, k: (m, n)),
                scratch_shapes=[pltpu.VMEM((tm, tn_eff), jnp.float32)],
            ),
            compiler_params=pltpu.CompilerParams(
                dimension_semantics=("parallel", "parallel", "arbitrary"),
                vmem_limit_bytes=vmem_limit,
            ),
            cost_estimate=pl.CostEstimate(flops=int(flops), transcendentals=0,
                                          bytes_accessed=int(bytes_accessed)),
        )(eps_arr, w_stacked, e_pad)

    h_u = out[:B, :D]
    h_v = out[b_pad:b_pad + B, :D]
    return jnp.concatenate([h_u, h_v], axis=1)                      # (B, 2*D)


# ------------------------------------------------------------------------- #
# Sparse gather kernel: 8 batch nodes per grid step (fills the sublane axis),
# E pinned in VMEM once, rows gathered by dynamic indexing, indices/coeffs in
# flat 1D SMEM arrays, self (h_v) term handled once per node.
# ------------------------------------------------------------------------- #
def mean_aggregator_sparse(eps, neigh_idx, coeff_u, self_idx, self_coeff,
                           embed_matrix, *, tb=8):
    neigh_idx = np.asarray(neigh_idx)
    B, S = neigh_idx.shape
    N, D = embed_matrix.shape
    b_pad = _round_up(B, tb)
    b_tiles = b_pad // tb

    e_bytes = N * D * 4
    # TODO(synk): for graphs whose embedding matrix does not fit VMEM, switch
    # to a manual double-buffered HBM row gather (pl.ANY + make_async_copy).
    assert e_bytes <= 44 * 1024 * 1024, "embedding matrix too large for VMEM-resident sparse path"

    idx_flat = jnp.zeros((b_pad, S), jnp.int32).at[:B].set(
        jnp.asarray(neigh_idx, jnp.int32)).reshape(b_pad * S)
    cu_flat = jnp.zeros((b_pad, S), jnp.float32).at[:B].set(
        jnp.asarray(coeff_u, jnp.float32)).reshape(b_pad * S)
    sidx = jnp.zeros((b_pad,), jnp.int32).at[:B].set(jnp.asarray(self_idx, jnp.int32))
    sc = jnp.zeros((b_pad,), jnp.float32).at[:B].set(jnp.asarray(self_coeff, jnp.float32))
    eps_arr = jnp.asarray(eps, jnp.float32).reshape(1)
    e_f32 = jnp.asarray(embed_matrix, jnp.float32)

    def kernel(idx_ref, cu_ref, sidx_ref, sc_ref, eps_ref, e_ref,
               out_u_ref, out_v_ref):
        b = pl.program_id(0)
        base = b * (tb * S)

        def gather_tile(index_coeff_fn):
            rows = []
            for r in range(tb):                      # static unroll: 8 sublanes
                j, c = index_coeff_fn(r)
                rows.append(c * e_ref[pl.ds(j, 1), :])      # scalar * (1, D)
            return jnp.concatenate(rows, axis=0)            # (tb, D)

        def body(s, acc):
            def ic(r):
                off = base + r * S + s
                return idx_ref[off], cu_ref[off]
            return acc + gather_tile(ic)

        h_u = lax.fori_loop(0, S, body, jnp.zeros((tb, D), jnp.float32),
                            unroll=True)
        out_u_ref[...] = h_u.astype(out_u_ref.dtype)

        # Self / h_v term, once per node (coeff is nonzero only at the self slot).
        def ic_self(r):
            off = b * tb + r
            return sidx_ref[off], sc_ref[off]
        out_v_ref[...] = (eps_ref[0] * gather_tile(ic_self)).astype(out_v_ref.dtype)

    flops = 2 * b_pad * S * D + 2 * b_pad * D
    bytes_accessed = e_bytes + b_pad * S * 8 + b_pad * 8 + 2 * b_pad * D * 4
    vmem_limit = int(min(48 * 1024 * 1024, e_bytes + 8 * 1024 * 1024))

    out_u, out_v = pl.pallas_call(
        kernel,
        out_shape=(jax.ShapeDtypeStruct((b_pad, D), jnp.float32),
                   jax.ShapeDtypeStruct((b_pad, D), jnp.float32)),
        grid_spec=pltpu.PrefetchScalarGridSpec(
            num_scalar_prefetch=0,
            grid=(b_tiles,),
            in_specs=[
                pl.BlockSpec(memory_space=pltpu.MemorySpace.SMEM),   # idx (B*S,)
                pl.BlockSpec(memory_space=pltpu.MemorySpace.SMEM),   # coeff_u (B*S,)
                pl.BlockSpec(memory_space=pltpu.MemorySpace.SMEM),   # self idx (B,)
                pl.BlockSpec(memory_space=pltpu.MemorySpace.SMEM),   # self coeff (B,)
                pl.BlockSpec(memory_space=pltpu.MemorySpace.SMEM),   # eps (1,)
                pl.BlockSpec(memory_space=pltpu.MemorySpace.VMEM),   # E resident
            ],
            out_specs=(pl.BlockSpec((tb, D), lambda b: (b, 0)),
                       pl.BlockSpec((tb, D), lambda b: (b, 0))),
        ),
        compiler_params=pltpu.CompilerParams(
            dimension_semantics=("parallel",),        # v7x: shard batch over 2 TCs
            vmem_limit_bytes=vmem_limit,
        ),
        cost_estimate=pl.CostEstimate(flops=int(flops), transcendentals=0,
                                      bytes_accessed=int(bytes_accessed)),
    )(idx_flat, cu_flat, sidx, sc, eps_arr, e_f32)

    return jnp.concatenate([out_u[:B], out_v[:B]], axis=1)          # (B, 2*D)


# ------------------------------------------------------------------------- #
# Host-side glue: neighbor sampling + encoding into sparse (idx/coeff) and
# dense (weight matrix) operands.  Python set bookkeeping stays on the host,
# exactly as in the original module.
# ------------------------------------------------------------------------- #
def build_operands(nodes, to_neighs, normalized_adj, num_nodes, num_sample, seed=0):
    rng = random.Random(seed)
    B = len(nodes)
    samp_sets = []
    for i, node in enumerate(nodes):
        neighs = to_neighs[i]
        if num_sample is not None and len(neighs) >= num_sample:
            samp = set(rng.sample(sorted(neighs), num_sample))
        else:
            samp = set(neighs)
        samp_sets.append(samp)

    S = max(1, max(sum(1 for j in s if j != n) for s, n in zip(samp_sets, nodes)))
    neigh_idx = np.zeros((B, S), np.int32)
    coeff_u = np.zeros((B, S), np.float32)
    self_idx = np.zeros((B,), np.int32)
    self_coeff = np.zeros((B,), np.float32)
    w_u_scaled = np.zeros((B, num_nodes), np.float32)   # 1/num_neigh folded in
    w_v = np.zeros((B, num_nodes), np.float32)

    for i, (node, samp) in enumerate(zip(nodes, samp_sets)):
        others = sorted(j for j in samp if j != node)
        n = len(others)
        inv = (1.0 / n) if n > 0 else 0.0   # TODO(synk): PyTorch divides by 0 here.
        for s, j in enumerate(others):
            c = float(normalized_adj[node, j]) * inv
            neigh_idx[i, s] = j
            coeff_u[i, s] = c
            w_u_scaled[i, j] += c
        if node in samp:
            c = float(normalized_adj[node, node])
            self_idx[i] = node
            self_coeff[i] = c
            w_v[i, node] = c
    return neigh_idx, coeff_u, self_idx, self_coeff, w_u_scaled, w_v


# ------------------------------------------------------------------------- #
if __name__ == "__main__":
    N = 128          # total number of nodes (full_nodes)
    D = 128          # embedding dim
    B = 8            # batch of nodes to aggregate
    NUM_SAMPLE = 10

    key = jax.random.PRNGKey(0)
    k_feat, k_adj = jax.random.split(key)

    embed_matrix = jax.random.normal(k_feat, (N, D), dtype=jnp.float32)
    normalized_adj = np.asarray(
        jax.random.uniform(k_adj, (N, N), dtype=jnp.float32, minval=0.1, maxval=1.0)
    )

    # Deterministic random graph: each node's neighbor set includes itself
    # plus 12 random other nodes (exercises the self / h_v path).
    graph_rng = random.Random(42)
    to_neighs_all = []
    for v in range(N):
        others = graph_rng.sample([u for u in range(N) if u != v], 12)
        to_neighs_all.append(set(others) | {v})

    nodes = list(range(B))
    to_neighs = [to_neighs_all[v] for v in nodes]

    # eps parameter initialized exactly as reset_parameters does.
    eps = np.array([0.0397 / math.sqrt(1)], dtype=np.float32)

    (neigh_idx, coeff_u, self_idx, self_coeff,
     w_u_scaled, w_v) = build_operands(nodes, to_neighs, normalized_adj, N,
                                       NUM_SAMPLE, seed=0)

    # NumPy reference of the same math.
    E_np = np.asarray(embed_matrix)
    ref = np.concatenate(
        [w_u_scaled @ E_np, float(eps[0]) * (w_v @ E_np)], axis=1
    ).astype(np.float32)

    # --- dense, resident-E variant ---
    out_dense = jax.block_until_ready(
        mean_aggregator_dense(eps, w_u_scaled, w_v, embed_matrix))
    np.testing.assert_allclose(np.asarray(out_dense), ref, rtol=5e-3, atol=5e-3)
    assert out_dense.shape == (B, 2 * D)

    # --- dense, forced streaming (K/D tiled) variant ---
    out_stream = jax.block_until_ready(
        mean_aggregator_dense(eps, w_u_scaled, w_v, embed_matrix,
                              resident_budget_bytes=0))
    np.testing.assert_allclose(np.asarray(out_stream), ref, rtol=5e-3, atol=5e-3)
    assert out_stream.shape == (B, 2 * D)

    # --- sparse gather kernel (8 nodes / grid step, VMEM-resident E) ---
    out_sparse = jax.block_until_ready(
        mean_aggregator_sparse(eps, neigh_idx, coeff_u, self_idx, self_coeff,
                               embed_matrix))
    np.testing.assert_allclose(np.asarray(out_sparse), ref, rtol=1e-4, atol=1e-4)
    assert out_sparse.shape == (B, 2 * D)

    print("KERNEL_OK")
</pallas_src>

<mosaic_0001>
module attributes {stable_mosaic.version = 11 : i64} {
  func.func @kernel(%arg0: i32, %arg1: memref<1xf32, #tpu.memory_space<smem>>, %arg2: memref<128x128xf32, #tpu.memory_space<vmem>>, %arg3: memref<128x128xf32, #tpu.memory_space<vmem>>, %arg4: memref<128x128xf32, #tpu.memory_space<vmem>>) attributes {dimension_semantics = [#tpu.dimension_semantics<parallel>], iteration_bounds = array<i64: 2>, scalar_prefetch = 0 : i64, scratch_operands = 0 : i64, tpu.core_type = #tpu.core_type<tc>, window_params = [{transform_indices = @transform_0, window_bounds = array<i64: 1>}, {transform_indices = @transform_1, window_bounds = array<i64: 128, 128>}, {pipeline_mode = #tpu.pipeline_mode<synchronous>, transform_indices = @transform_2, window_bounds = array<i64: 128, 128>}, {transform_indices = @transform_3, window_bounds = array<i64: 128, 128>}]} {
    %c128_i32 = arith.constant 128 : i32
    %0 = arith.muli %arg0, %c128_i32 : i32
    %c128_i32_0 = arith.constant 128 : i32
    %1 = arith.cmpi sge, %0, %c128_i32_0 : i32
    %c0 = arith.constant 0 : index
    %2 = memref.load %arg1[%c0] : memref<1xf32, #tpu.memory_space<smem>>
    %cst = arith.constant 1.000000e+00 : f32
    %3 = arith.select %1, %2, %cst : f32
    %c0_1 = arith.constant 0 : index
    %c0_2 = arith.constant 0 : index
    %4 = vector.load %arg2[%c0_1, %c0_2] : memref<128x128xf32, #tpu.memory_space<vmem>>, vector<128x128xf32>
    %c0_3 = arith.constant 0 : index
    %c0_4 = arith.constant 0 : index
    %5 = vector.load %arg3[%c0_3, %c0_4] : memref<128x128xf32, #tpu.memory_space<vmem>>, vector<128x128xf32>
    %cst_5 = arith.constant dense<0.000000e+00> : vector<128x128xf32>
    %6 = tpu.matmul %4, %5, %cst_5 {dimension_numbers = #tpu.dot_dimension_numbers<[1], [0], [0], [1], [0, 0, 1, 1], [], []>, precision = #tpu.contract_precision<fp32>} : vector<128x128xf32>, vector<128x128xf32>, vector<128x128xf32> -> vector<128x128xf32>
    %7 = vector.broadcast %3 : f32 to vector<128x128xf32>
    %8 = arith.mulf %7, %6 : vector<128x128xf32>
    %c0_6 = arith.constant 0 : index
    %c0_7 = arith.constant 0 : index
    %9 = vector.load %arg4[%c0_6, %c0_7] : memref<128x128xf32, #tpu.memory_space<vmem>>, vector<128x128xf32>
    tpu.vector_store %arg4[%c0_6, %c0_7], %8 {strides = array<i32>} : memref<128x128xf32, #tpu.memory_space<vmem>>, vector<128x128xf32>,
    return
  }
  func.func @transform_0(%arg0: i32) -> i32 {
    %c0_i32 = arith.constant 0 : i32
    %c0_i32_0 = arith.constant 0 : i32
    return %c0_i32 : i32
  }
  func.func @transform_1(%arg0: i32) -> (i32, i32) {
    %c0_i32 = arith.constant 0 : i32
    %c0_i32_0 = arith.constant 0 : i32
    return %arg0, %c0_i32 : i32, i32
  }
  func.func @transform_2(%arg0: i32) -> (i32, i32) {
    %c0_i32 = arith.constant 0 : i32
    %c0_i32_0 = arith.constant 0 : i32
    %c0_i32_1 = arith.constant 0 : i32
    return %c0_i32, %c0_i32_0 : i32, i32
  }
  func.func @transform_3(%arg0: i32) -> (i32, i32) {
    %c0_i32 = arith.constant 0 : i32
    %c0_i32_0 = arith.constant 0 : i32
    return %arg0, %c0_i32 : i32, i32
  }
}

</mosaic_0001>

<llo_original>
// kernel: tpu_custom_call.1
$region0: #{tpu_custom_call.1}
  #allocation0 [shape = 'u32[]', space=smem, size = 0x4, offset = 0x4, fixed_abs, tag = 'smem constant byte address 0x4 - core index']
  #allocation1 [shape = 'u32[144,128]{1,0:T(1,128)}', space=vmem, size = 0x12000, scoped, tag = 'internal scratch']
  #allocation2 [shape = 'f32[1]{0:T(128)S(6)}', space=smem, size = 0x200, scoped, tag = 'scoped memory for tpu_custom_call.1']
  %s0 = inlined_call_operand.<no memory space> [shape: f32[1], index: 0, kind: input, shape index: {}]
  %s1 = inlined_call_operand.hbm [shape: f32[256,128], index: 1, kind: input, shape index: {}]
  %s2 = inlined_call_operand.hbm [shape: f32[128,128], index: 2, kind: input, shape index: {}]
  %s3 = inlined_call_operand.hbm [shape: f32[256,128], index: 3, kind: output, shape index: {}]
  %s4 = sld [smem:[#allocation0]]
  $region53: #{tpu_custom_call.1} parent=0
    _
  %s6 = ssub.s32 1, %s4
  %s7 = scalar_select 0, %s6, %s4
  %8 = sst [smem:[#allocation2]] %s0
  $region1: #{tpu_custom_call.1} parent=0
    #allocation3 [shape = 'u8[131072]{0}', space=vmem, size = 0x20000, scoped, tag = 'input window, operand 1']
    #allocation4 [shape = 's32[2]{0}', space=sflag, size = 0x8, scoped, tag = 'scoped memory for tpu_custom_call.1']
    #allocation5 [shape = 's32[2]{0}', space=sflag, size = 0x8, scoped, tag = 'scoped memory for tpu_custom_call.1']
    #allocation6 [shape = 'u8[65536]{0}', space=vmem, size = 0x10000, scoped, tag = 'input window, operand 2, single buffered']
    #allocation7 [shape = 's32[1]{0}', space=sflag, size = 0x4, scoped, tag = 'scoped memory for tpu_custom_call.1']
    #allocation8 [shape = 'u8[131072]{0}', space=vmem, size = 0x20000, scoped, tag = 'output window, operand 0']
    %9 = vsyncpa [#allocation4], 0
    %s10 = scalar_lea.sflag [#allocation4], 1
    %11 = vsyncpa %s10, 0
    %12 = vsyncpa [#allocation7], 0
    %13 = vsyncpa [#allocation5], 0
    %s14 = scalar_lea.sflag [#allocation5], 1
    %15 = vsyncpa %s14, 0
    loop: start=0, step=1, limit=4
    $region2: #{tpu_custom_call.1} parent=1 // loop_pre_header
      _
    $region3: #{tpu_custom_call.1} parent=1 // loop_header
      %s17 = sphi 0, %s21
      %p18 = scmp.ge.s32.totalorder %s17, 4
      %s25 = sphi 0, %s25
      %s27 = sphi 0, %s25
      %s28 = sphi 0, %s27
      %s42 = sphi 0, %s28
      %s48 = sphi 0, %s50
      %s51 = sphi 0, %s48
      %s52 = sphi 0, %s51
      %s68 = sphi 0, %s52
      %s72 = sphi 0, %s72
      %s74 = sphi 0, %s72
      %s75 = sphi 0, %s74
      %s89 = sphi 0, %s75
      %s95 = sphi 0, %s97
      %s98 = sphi 0, %s95
      %s99 = sphi 0, %s98
      %s115 = sphi 0, %s99
    $region4: #{tpu_custom_call.1} parent=1 // loop_header_branch
      %20 = sbr.rel (%p18) target = $region8
    $region5: #{tpu_custom_call.1} parent=1 // loop_body
      %s22 = ssub.s32 %s17, 1
      %s23 = ssub.s32 %s17, 2
      %s24 = sadd.s32 %s17, 1
      %s26 = sadd.s32 %s25, 1
      %p29 = scmp.eq.s32.totalorder %s17, 1
      %p30 = scmp.ne.s32.totalorder %s25, %s27
      %p31 = scmp.eq.s32.totalorder %s17, 0
      %p32 = por %p30, %p31
      %p33 = scmp.ne.s32.totalorder %s25, %s27
      %p34 = scmp.eq.s32.totalorder %s22, 1
      %p35 = por %p33, %p34
      %p36 = scmp.ne.s32.totalorder %s27, %s28
      %p37 = scmp.eq.s32.totalorder %s22, 0
      %p38 = por %p36, %p37
      %p39 = scmp.ne.s32.totalorder %s27, %s28
      %p40 = scmp.eq.s32.totalorder %s23, 1
      %p41 = por %p39, %p40
      %p43 = scmp.ne.s32.totalorder %s28, %s42
      %p44 = scmp.eq.s32.totalorder %s23, 0
      %p45 = por %p43, %p44
      %s46 = ssub.s32 %s17, %s24
      %p47 = scmp.eq.s32.totalorder %s46, 0
      %s49 = sadd.s32 %s48, 1
      %s50 = scalar_select %p47, %s48, %s49
      %p53 = pneg %p47
      %p54 = scmp.eq.s32.totalorder %s17, 1
      %p55 = por %p53, %p54
      %p56 = scmp.ne.s32.totalorder %s48, %s51
      %p57 = scmp.eq.s32.totalorder %s17, 0
      %p58 = por %p56, %p57
      %p59 = scmp.ne.s32.totalorder %s48, %s51
      %p60 = scmp.eq.s32.totalorder %s22, 1
      %p61 = por %p59, %p60
      %p62 = scmp.ne.s32.totalorder %s51, %s52
      %p63 = scmp.eq.s32.totalorder %s22, 0
      %p64 = por %p62, %p63
      %p65 = scmp.ne.s32.totalorder %s51, %s52
      %p66 = scmp.eq.s32.totalorder %s23, 1
      %p67 = por %p65, %p66
      %p69 = scmp.ne.s32.totalorder %s52, %s68
      %p70 = scmp.eq.s32.totalorder %s23, 0
      %p71 = por %p69, %p70
      %s73 = sadd.s32 %s72, 1
      %p76 = scmp.eq.s32.totalorder %s17, 1
      %p77 = scmp.ne.s32.totalorder %s72, %s74
      %p78 = scmp.eq.s32.totalorder %s17, 0
      %p79 = por %p77, %p78
      %p80 = scmp.ne.s32.totalorder %s72, %s74
      %p81 = scmp.eq.s32.totalorder %s22, 1
      %p82 = por %p80, %p81
      %p83 = scmp.ne.s32.totalorder %s74, %s75
      %p84 = scmp.eq.s32.totalorder %s22, 0
      %p85 = por %p83, %p84
      %p86 = scmp.ne.s32.totalorder %s74, %s75
      %p87 = scmp.eq.s32.totalorder %s23, 1
      %p88 = por %p86, %p87
      %p90 = scmp.ne.s32.totalorder %s75, %s89
      %p91 = scmp.eq.s32.totalorder %s23, 0
      %p92 = por %p90, %p91
      %s93 = ssub.s32 %s17, %s24
      %p94 = scmp.eq.s32.totalorder %s93, 0
      %s96 = sadd.s32 %s95, 1
      %s97 = scalar_select %p94, %s95, %s96
      %p100 = pneg %p94
      %p101 = scmp.eq.s32.totalorder %s17, 1
      %p102 = por %p100, %p101
      %p103 = scmp.ne.s32.totalorder %s95, %s98
      %p104 = scmp.eq.s32.totalorder %s17, 0
      %p105 = por %p103, %p104
      %p106 = scmp.ne.s32.totalorder %s95, %s98
      %p107 = scmp.eq.s32.totalorder %s22, 1
      %p108 = por %p106, %p107
      %p109 = scmp.ne.s32.totalorder %s98, %s99
      %p110 = scmp.eq.s32.totalorder %s22, 0
      %p111 = por %p109, %p110
      %p112 = scmp.ne.s32.totalorder %s98, %s99
      %p113 = scmp.eq.s32.totalorder %s23, 1
      %p114 = por %p112, %p113
      %p116 = scmp.ne.s32.totalorder %s99, %s115
      %p117 = scmp.eq.s32.totalorder %s23, 0
      %p118 = por %p116, %p117
      %p119 = scmp.le.s32.totalorder 1, %s17
      %p120 = scmp.lt.s32.totalorder %s17, 3
      %p121 = pnand %p119, %p120
      %p122 = pneg %p121
      // Predicated region
      $region9: #{tpu_custom_call.1} parent=5 // pred_check
        _
      $region10: #{tpu_custom_call.1} parent=5 // pred_check_branch
        %124 = sbr.rel (%p121) target = $region12
      $region11: #{tpu_custom_call.1} parent=5 // pred_region
        %s125 = ssub.s32 %s17, 1
        // Predicated region
        $region13: #{tpu_custom_call.1} parent=11 // pred_check
          %p126 = pneg %p38
        $region14: #{tpu_custom_call.1} parent=11 // pred_check_branch
          %128 = sbr.rel (%p126) target = $region16
        $region15: #{tpu_custom_call.1} parent=11 // pred_region
          _
        $region16: #{tpu_custom_call.1} parent=11 // pred_fallthru
          _
        // Predicated region
        $region17: #{tpu_custom_call.1} parent=11 // pred_check
          %p129 = pneg %p85
        $region18: #{tpu_custom_call.1} parent=11 // pred_check_branch
          %131 = sbr.rel (%p129) target = $region20
        $region19: #{tpu_custom_call.1} parent=11 // pred_region
          %s133 = ssub.s32 2048, 2048
          %134 = vsyncadd [#allocation7], %s133
          %s135 = sshll.u32 [#allocation6], 4
          %s136 = int_to_ptr.vmem [resolvable:$true] %s135
          %141 = dma.hbm_to_vmem [thread:$0]  %s2, 2048, %s136, [#allocation7], 128, 128, 8
        $region20: #{tpu_custom_call.1} parent=11 // pred_fallthru
          _
      $region12: #{tpu_custom_call.1} parent=5 // pred_fallthru
        _
      %p142 = scmp.lt.s32.totalorder %s17, 2
      // Predicated region
      $region21: #{tpu_custom_call.1} parent=5 // pred_check
        %p143 = pneg %p142
      $region22: #{tpu_custom_call.1} parent=5 // pred_check_branch
        %145 = sbr.rel (%p143) target = $region24
      $region23: #{tpu_custom_call.1} parent=5 // pred_region
        // Predicated region
        $region25: #{tpu_custom_call.1} parent=23 // pred_check
          %p146 = pneg %p58
        $region26: #{tpu_custom_call.1} parent=23 // pred_check_branch
          %148 = sbr.rel (%p146) target = $region28
        $region27: #{tpu_custom_call.1} parent=23 // pred_region
          %s149 = sand.u32 %s48, 1
          %s150 = scalar_lea.sflag [#allocation4], %s149
          %s151 = sand.u32 %s48, 1
          %s152 = smul.addr %s151, 128
          %s153 = scalar_lea.vmem [#allocation3], %s152
          %s154 = smul.u32 16, %s17
          %s156 = ssub.s32 2048, 2048
          %157 = vsyncadd %s150, %s156
          %s158 = smul.addr %s154, 128
          %s159 = scalar_lea.hbm %s1, %s158
          %s160 = sshll.u32 %s153, 4
          %s161 = int_to_ptr.vmem [resolvable:$true] %s160
          %166 = dma.hbm_to_vmem [thread:$0]  %s159, 2048, %s161, %s150, 128, 128, 8
        $region28: #{tpu_custom_call.1} parent=23 // pred_fallthru
          _
      $region24: #{tpu_custom_call.1} parent=5 // pred_fallthru
        _
      %p167 = scmp.le.s32.totalorder 1, %s17
      %p168 = scmp.lt.s32.totalorder %s17, 3
      %p169 = pnand %p167, %p168
      %p170 = pneg %p169
      // Predicated region
      $region29: #{tpu_custom_call.1} parent=5 // pred_check
        _
      $region30: #{tpu_custom_call.1} parent=5 // pred_check_branch
        %172 = sbr.rel (%p169) target = $region32
      $region31: #{tpu_custom_call.1} parent=5 // pred_region
        %s173 = ssub.s32 %s17, 1
        %s174 = sand.u32 %s51, 1
        %s175 = scalar_lea.sflag [#allocation4], %s174
        %s176 = sand.u32 %s51, 1
        %s177 = smul.addr %s176, 128
        %s178 = scalar_lea.vmem [#allocation3], %s177
        // Predicated region
        $region33: #{tpu_custom_call.1} parent=31 // pred_check
          %p179 = pneg %p64
        $region34: #{tpu_custom_call.1} parent=31 // pred_check_branch
          %181 = sbr.rel (%p179) target = $region36
        $region35: #{tpu_custom_call.1} parent=31 // pred_region
          %182 = dma.done %s175, 2048
        $region36: #{tpu_custom_call.1} parent=31 // pred_fallthru
          _
        // Predicated region
        $region37: #{tpu_custom_call.1} parent=31 // pred_check
          %p183 = pneg %p85
        $region38: #{tpu_custom_call.1} parent=31 // pred_check_branch
          %185 = sbr.rel (%p183) target = $region40
        $region39: #{tpu_custom_call.1} parent=31 // pred_region
          %186 = dma.done [#allocation7], 2048
        $region40: #{tpu_custom_call.1} parent=31 // pred_fallthru
          _
        %p187 = pneg %p38
        %p188 = pneg %p35
        %s189 = sand.u32 %s51, 1
        %s190 = scalar_lea.sflag [#allocation4], %s189
        %s191 = sand.u32 %s51, 1
        %s192 = smul.addr %s191, 128
        %s193 = scalar_lea.vmem [#allocation3], %s192
        %p194 = pneg %p64
        %p195 = pneg %p61
        %p196 = pneg %p85
        %p197 = pneg %p82
        %p198 = pneg %p111
        %p199 = pneg %p108
        %s200 = sand.u32 %s98, 1
        %s201 = scalar_lea.sflag [#allocation5], %s200
        %s202 = sand.u32 %s98, 1
        %s203 = smul.addr %s202, 128
        %s204 = scalar_lea.vmem [#allocation8], %s203
        %s205 = smul.u32 16, %s22
        %s206 = smul.u32 16, %s22
        %s207 = smul.u32 %s22, 128
        %p208 = scmp.ge.s32.totalorder %s207, 128
        %s209 = sld [smem:[#allocation2]]
        %s210 = scalar_select %p208, %s209, 1.0
        %v211 = vld [vmem:[%s178] sm:$0xff]
        %v212 = vld [vmem:[%s178 + $0x8] sm:$0xff]
        %v213 = vld [vmem:[%s178 + $0x10] sm:$0xff]
        %v214 = vld [vmem:[%s178 + $0x18] sm:$0xff]
        %v215 = vld [vmem:[%s178 + $0x20] sm:$0xff]
        %v216 = vld [vmem:[%s178 + $0x28] sm:$0xff]
        %v217 = vld [vmem:[%s178 + $0x30] sm:$0xff]
        %v218 = vld [vmem:[%s178 + $0x38] sm:$0xff]
        %v219 = vld [vmem:[%s178 + $0x40] sm:$0xff]
        %v220 = vld [vmem:[%s178 + $0x48] sm:$0xff]
        %v221 = vld [vmem:[%s178 + $0x50] sm:$0xff]
        %v222 = vld [vmem:[%s178 + $0x58] sm:$0xff]
        %v223 = vld [vmem:[%s178 + $0x60] sm:$0xff]
        %v224 = vld [vmem:[%s178 + $0x68] sm:$0xff]
        %v225 = vld [vmem:[%s178 + $0x70] sm:$0xff]
        %v226 = vld [vmem:[%s178 + $0x78] sm:$0xff]
        %v227 = vld [vmem:[#allocation6] sm:$0xff]
        %v228 = vld [vmem:[#allocation6 + $0x8] sm:$0xff]
        %v229 = vld [vmem:[#allocation6 + $0x10] sm:$0xff]
        %v230 = vld [vmem:[#allocation6 + $0x18] sm:$0xff]
        %v231 = vld [vmem:[#allocation6 + $0x20] sm:$0xff]
        %v232 = vld [vmem:[#allocation6 + $0x28] sm:$0xff]
        %v233 = vld [vmem:[#allocation6 + $0x30] sm:$0xff]
        %v234 = vld [vmem:[#allocation6 + $0x38] sm:$0xff]
        %v235 = vld [vmem:[#allocation6 + $0x40] sm:$0xff]
        %v236 = vld [vmem:[#allocation6 + $0x48] sm:$0xff]
        %v237 = vld [vmem:[#allocation6 + $0x50] sm:$0xff]
        %v238 = vld [vmem:[#allocation6 + $0x58] sm:$0xff]
        %v239 = vld [vmem:[#allocation6 + $0x60] sm:$0xff]
        %v240 = vld [vmem:[#allocation6 + $0x68] sm:$0xff]
        %v241 = vld [vmem:[#allocation6 + $0x70] sm:$0xff]
        %v242 = vld [vmem:[#allocation6 + $0x78] sm:$0xff]
        %243 = vmatprep.subr.mxu0 0.0
        %v244 = vand.u32 %v242, 4294901760
        %245 = vmatpush1.msra.mxu0 %v244
        %246 = vmatprep.subr.mxu0 0.0
        %v247 = vand.u32 %v241, 4294901760
        %248 = vmatpush1.msra.mxu0 %v247
        %249 = vmatprep.subr.mxu0 0.0
        %v250 = vand.u32 %v240, 4294901760
        %251 = vmatpush1.msra.mxu0 %v250
        %252 = vmatprep.subr.mxu0 0.0
        %v253 = vand.u32 %v239, 4294901760
        %254 = vmatpush1.msra.mxu0 %v253
        %255 = vmatprep.subr.mxu0 0.0
        %v256 = vand.u32 %v238, 4294901760
        %257 = vmatpush1.msra.mxu0 %v256
        %258 = vmatprep.subr.mxu0 0.0
        %v259 = vand.u32 %v237, 4294901760
        %260 = vmatpush1.msra.mxu0 %v259
        %261 = vmatprep.subr.mxu0 0.0
        %v262 = vand.u32 %v236, 4294901760
        %263 = vmatpush1.msra.mxu0 %v262
        %264 = vmatprep.subr.mxu0 0.0
        %v265 = vand.u32 %v235, 4294901760
        %266 = vmatpush1.msra.mxu0 %v265
        %267 = vmatprep.subr.mxu0 0.0
        %v268 = vand.u32 %v234, 4294901760
        %269 = vmatpush1.msra.mxu0 %v268
        %270 = vmatprep.subr.mxu0 0.0
        %v271 = vand.u32 %v233, 4294901760
        %272 = vmatpush1.msra.mxu0 %v271
        %273 = vmatprep.subr.mxu0 0.0
        %v274 = vand.u32 %v232, 4294901760
        %275 = vmatpush1.msra.mxu0 %v274
        %276 = vmatprep.subr.mxu0 0.0
        %v277 = vand.u32 %v231, 4294901760
        %278 = vmatpush1.msra.mxu0 %v277
        %279 = vmatprep.subr.mxu0 0.0
        %v280 = vand.u32 %v230, 4294901760
        %281 = vmatpush1.msra.mxu0 %v280
        %282 = vmatprep.subr.mxu0 0.0
        %v283 = vand.u32 %v229, 4294901760
        %284 = vmatpush1.msra.mxu0 %v283
        %285 = vmatprep.subr.mxu0 0.0
        %v286 = vand.u32 %v228, 4294901760
        %287 = vmatpush1.msra.mxu0 %v286
        %288 = vmatprep.subr.mxu0 0.0
        %v289 = vand.u32 %v227, 4294901760
        %290 = vmatpush1.msra.mxu0 %v289
        %291 = vmatprep.subr.mxu0 0.0
        %292 = vmatpush2.msra.mxu0 0.0
        %293 = vmatprep.subr.mxu0 0.0
        %294 = vmatpush2.msra.mxu0 0.0
        %295 = vmatprep.subr.mxu0 0.0
        %296 = vmatpush2.msra.mxu0 0.0
        %297 = vmatprep.subr.mxu0 0.0
        %298 = vmatpush2.msra.mxu0 0.0
        %299 = vmatprep.subr.mxu0 0.0
        %300 = vmatpush2.msra.mxu0 0.0
        %301 = vmatprep.subr.mxu0 0.0
        %302 = vmatpush2.msra.mxu0 0.0
        %303 = vmatprep.subr.mxu0 0.0
        %304 = vmatpush2.msra.mxu0 0.0
        %305 = vmatprep.subr.mxu0 0.0
        %306 = vmatpush2.msra.mxu0 0.0
        %307 = vmatprep.subr.mxu0 0.0
        %308 = vmatpush2.msra.mxu0 0.0
        %309 = vmatprep.subr.mxu0 0.0
        %310 = vmatpush2.msra.mxu0 0.0
        %311 = vmatprep.subr.mxu0 0.0
        %312 = vmatpush2.msra.mxu0 0.0
        %313 = vmatprep.subr.mxu0 0.0
        %314 = vmatpush2.msra.mxu0 0.0
        %315 = vmatprep.subr.mxu0 0.0
        %316 = vmatpush2.msra.mxu0 0.0
        %317 = vmatprep.subr.mxu0 0.0
        %318 = vmatpush2.msra.mxu0 0.0
        %319 = vmatprep.subr.mxu0 0.0
        %320 = vmatpush2.msra.mxu0 0.0
        %321 = vmatprep.subr.mxu0 0.0
        %322 = vmatpush2.msra.mxu0 0.0
        %323 = vmatprep.mubr.f32.mxu0 0.0
        %v324 = vand.u32 %v211, 4294901760
        %v325 = vsub.f32 %v211, %v324
        %v326 = vand.u32 %v325, 4294901760
        %v327 = vsub.f32 %v325, %v326
        %v328 = vand.u32 %v327, 4294901760
        %329 = vmatmul.mubr.f32.gmra.mxu0 %v328
        %v330 = vpop.f32.mrf.mxu0
        %v331 = vadd.f32 0.0, %v330
        %v332 = vpop.f32.mrf.mxu0
        %333 = vmatprep.mubr.f32.mxu0 0.0
        %v334 = vand.u32 %v212, 4294901760
        %v335 = vsub.f32 %v212, %v334
        %v336 = vand.u32 %v335, 4294901760
        %v337 = vsub.f32 %v335, %v336
        %v338 = vand.u32 %v337, 4294901760
        %339 = vmatmul.mubr.f32.gmra.mxu0 %v338
        %v340 = vpop.f32.mrf.mxu0
        %v341 = vadd.f32 0.0, %v340
        %v342 = vpop.f32.mrf.mxu0
        %343 = vmatprep.mubr.f32.mxu0 0.0
        %v344 = vand.u32 %v213, 4294901760
        %v345 = vsub.f32 %v213, %v344
        %v346 = vand.u32 %v345, 4294901760
        %v347 = vsub.f32 %v345, %v346
        %v348 = vand.u32 %v347, 4294901760
        %349 = vmatmul.mubr.f32.gmra.mxu0 %v348
        %v350 = vpop.f32.mrf.mxu0
        %v351 = vadd.f32 0.0, %v350
        %v352 = vpop.f32.mrf.mxu0
        %353 = vmatprep.mubr.f32.mxu0 0.0
        %v354 = vand.u32 %v214, 4294901760
        %v355 = vsub.f32 %v214, %v354
        %v356 = vand.u32 %v355, 4294901760
        %v357 = vsub.f32 %v355, %v356
        %v358 = vand.u32 %v357, 4294901760
        %359 = vmatmul.mubr.f32.gmra.mxu0 %v358
        %v360 = vpop.f32.mrf.mxu0
        %v361 = vadd.f32 0.0, %v360
        %v362 = vpop.f32.mrf.mxu0
        %363 = vmatprep.mubr.f32.mxu0 0.0
        %v364 = vand.u32 %v215, 4294901760
        %v365 = vsub.f32 %v215, %v364
        %v366 = vand.u32 %v365, 4294901760
        %v367 = vsub.f32 %v365, %v366
        %v368 = vand.u32 %v367, 4294901760
        %369 = vmatmul.mubr.f32.gmra.mxu0 %v368
        %v370 = vpop.f32.mrf.mxu0
        %v371 = vadd.f32 0.0, %v370
        %v372 = vpop.f32.mrf.mxu0
        %373 = vmatprep.mubr.f32.mxu0 0.0
        %v374 = vand.u32 %v216, 4294901760
        %v375 = vsub.f32 %v216, %v374
        %v376 = vand.u32 %v375, 4294901760
        %v377 = vsub.f32 %v375, %v376
        %v378 = vand.u32 %v377, 4294901760
        %379 = vmatmul.mubr.f32.gmra.mxu0 %v378
        %v380 = vpop.f32.mrf.mxu0
        %v381 = vadd.f32 0.0, %v380
        %v382 = vpop.f32.mrf.mxu0
        %383 = vmatprep.mubr.f32.mxu0 0.0
        %v384 = vand.u32 %v217, 4294901760
        %v385 = vsub.f32 %v217, %v384
        %v386 = vand.u32 %v385, 4294901760
        %v387 = vsub.f32 %v385, %v386
        %v388 = vand.u32 %v387, 4294901760
        %389 = vmatmul.mubr.f32.gmra.mxu0 %v388
        %v390 = vpop.f32.mrf.mxu0
        %v391 = vadd.f32 0.0, %v390
        %v392 = vpop.f32.mrf.mxu0
        %393 = vmatprep.mubr.f32.mxu0 0.0
        %v394 = vand.u32 %v218, 4294901760
        %v395 = vsub.f32 %v218, %v394
        %v396 = vand.u32 %v395, 4294901760
        %v397 = vsub.f32 %v395, %v396
        %v398 = vand.u32 %v397, 4294901760
        %399 = vmatmul.mubr.f32.gmra.mxu0 %v398
        %v400 = vpop.f32.mrf.mxu0
        %v401 = vadd.f32 0.0, %v400
        %v402 = vpop.f32.mrf.mxu0
        %403 = vmatprep.mubr.f32.mxu0 0.0
        %v404 = vand.u32 %v219, 4294901760
        %v405 = vsub.f32 %v219, %v404
        %v406 = vand.u32 %v405, 4294901760
        %v407 = vsub.f32 %v405, %v406
        %v408 = vand.u32 %v407, 4294901760
        %409 = vmatmul.mubr.f32.gmra.mxu0 %v408
        %v410 = vpop.f32.mrf.mxu0
        %v411 = vadd.f32 0.0, %v410
        %v412 = vpop.f32.mrf.mxu0
        %413 = vmatprep.mubr.f32.mxu0 0.0
        %v414 = vand.u32 %v220, 4294901760
        %v415 = vsub.f32 %v220, %v414
        %v416 = vand.u32 %v415, 4294901760
        %v417 = vsub.f32 %v415, %v416
        %v418 = vand.u32 %v417, 4294901760
        %419 = vmatmul.mubr.f32.gmra.mxu0 %v418
        %v420 = vpop.f32.mrf.mxu0
        %v421 = vadd.f32 0.0, %v420
        %v422 = vpop.f32.mrf.mxu0
        %423 = vmatprep.mubr.f32.mxu0 0.0
        %v424 = vand.u32 %v221, 4294901760
        %v425 = vsub.f32 %v221, %v424
        %v426 = vand.u32 %v425, 4294901760
        %v427 = vsub.f32 %v425, %v426
        %v428 = vand.u32 %v427, 4294901760
        %429 = vmatmul.mubr.f32.gmra.mxu0 %v428
        %v430 = vpop.f32.mrf.mxu0
        %v431 = vadd.f32 0.0, %v430
        %v432 = vpop.f32.mrf.mxu0
        %433 = vmatprep.mubr.f32.mxu0 0.0
        %v434 = vand.u32 %v222, 4294901760
        %v435 = vsub.f32 %v222, %v434
        %v436 = vand.u32 %v435, 4294901760
        %v437 = vsub.f32 %v435, %v436
        %v438 = vand.u32 %v437, 4294901760
        %439 = vmatmul.mubr.f32.gmra.mxu0 %v438
        %v440 = vpop.f32.mrf.mxu0
        %v441 = vadd.f32 0.0, %v440
        %v442 = vpop.f32.mrf.mxu0
        %443 = vmatprep.mubr.f32.mxu0 0.0
        %v444 = vand.u32 %v223, 4294901760
        %v445 = vsub.f32 %v223, %v444
        %v446 = vand.u32 %v445, 4294901760
        %v447 = vsub.f32 %v445, %v446
        %v448 = vand.u32 %v447, 4294901760
        %449 = vmatmul.mubr.f32.gmra.mxu0 %v448
        %v450 = vpop.f32.mrf.mxu0
        %v451 = vadd.f32 0.0, %v450
        %v452 = vpop.f32.mrf.mxu0
        %453 = vmatprep.mubr.f32.mxu0 0.0
        %v454 = vand.u32 %v224, 4294901760
        %v455 = vsub.f32 %v224, %v454
        %v456 = vand.u32 %v455, 4294901760
        %v457 = vsub.f32 %v455, %v456
        %v458 = vand.u32 %v457, 4294901760
        %459 = vmatmul.mubr.f32.gmra.mxu0 %v458
        %v460 = vpop.f32.mrf.mxu0
        %v461 = vadd.f32 0.0, %v460
        %v462 = vpop.f32.mrf.mxu0
        %463 = vmatprep.mubr.f32.mxu0 0.0
        %v464 = vand.u32 %v225, 4294901760
        %v465 = vsub.f32 %v225, %v464
        %v466 = vand.u32 %v465, 4294901760
        %v467 = vsub.f32 %v465, %v466
        %v468 = vand.u32 %v467, 4294901760
        %469 = vmatmul.mubr.f32.gmra.mxu0 %v468
        %v470 = vpop.f32.mrf.mxu0
        %v471 = vadd.f32 0.0, %v470
        %v472 = vpop.f32.mrf.mxu0
        %473 = vmatprep.mubr.f32.mxu0 0.0
        %v474 = vand.u32 %v226, 4294901760
        %v475 = vsub.f32 %v226, %v474
        %v476 = vand.u32 %v475, 4294901760
        %v477 = vsub.f32 %v475, %v476
        %v478 = vand.u32 %v477, 4294901760
        %479 = vmatmul.mubr.f32.gmra.mxu0 %v478
        %v480 = vpop.f32.mrf.mxu0
        %v481 = vadd.f32 0.0, %v480
        %v482 = vpop.f32.mrf.mxu0
        %483 = vdwg.mxu0
        %484 = vmatprep.subr.mxu0 0.0
        %v485 = vand.u32 %v242, 4294901760
        %v486 = vsub.f32 %v242, %v485
        %v487 = vand.u32 %v486, 4294901760
        %v488 = vsub.f32 %v486, %v487
        %v489 = vand.u32 %v488, 4294901760
        %490 = vmatpush1.msra.mxu0 %v489
        %491 = vmatprep.subr.mxu0 0.0
        %v492 = vand.u32 %v241, 4294901760
        %v493 = vsub.f32 %v241, %v492
        %v494 = vand.u32 %v493, 4294901760
        %v495 = vsub.f32 %v493, %v494
        %v496 = vand.u32 %v495, 4294901760
        %497 = vmatpush1.msra.mxu0 %v496
        %498 = vmatprep.subr.mxu0 0.0
        %v499 = vand.u32 %v240, 4294901760
        %v500 = vsub.f32 %v240, %v499
        %v501 = vand.u32 %v500, 4294901760
        %v502 = vsub.f32 %v500, %v501
        %v503 = vand.u32 %v502, 4294901760
        %504 = vmatpush1.msra.mxu0 %v503
        %505 = vmatprep.subr.mxu0 0.0
        %v506 = vand.u32 %v239, 4294901760
        %v507 = vsub.f32 %v239, %v506
        %v508 = vand.u32 %v507, 4294901760
        %v509 = vsub.f32 %v507, %v508
        %v510 = vand.u32 %v509, 4294901760
        %511 = vmatpush1.msra.mxu0 %v510
        %512 = vmatprep.subr.mxu0 0.0
        %v513 = vand.u32 %v238, 4294901760
        %v514 = vsub.f32 %v238, %v513
        %v515 = vand.u32 %v514, 4294901760
        %v516 = vsub.f32 %v514, %v515
        %v517 = vand.u32 %v516, 4294901760
        %518 = vmatpush1.msra.mxu0 %v517
        %519 = vmatprep.subr.mxu0 0.0
        %v520 = vand.u32 %v237, 4294901760
        %v521 = vsub.f32 %v237, %v520
        %v522 = vand.u32 %v521, 4294901760
        %v523 = vsub.f32 %v521, %v522
        %v524 = vand.u32 %v523, 4294901760
        %525 = vmatpush1.msra.mxu0 %v524
        %526 = vmatprep.subr.mxu0 0.0
        %v527 = vand.u32 %v236, 4294901760
        %v528 = vsub.f32 %v236, %v527
        %v529 = vand.u32 %v528, 4294901760
        %v530 = vsub.f32 %v528, %v529
        %v531 = vand.u32 %v530, 4294901760
        %532 = vmatpush1.msra.mxu0 %v531
        %533 = vmatprep.subr.mxu0 0.0
        %v534 = vand.u32 %v235, 4294901760
        %v535 = vsub.f32 %v235, %v534
        %v536 = vand.u32 %v535, 4294901760
        %v537 = vsub.f32 %v535, %v536
        %v538 = vand.u32 %v537, 4294901760
        %539 = vmatpush1.msra.mxu0 %v538
        %540 = vmatprep.subr.mxu0 0.0
        %v541 = vand.u32 %v234, 4294901760
        %v542 = vsub.f32 %v234, %v541
        %v543 = vand.u32 %v542, 4294901760
        %v544 = vsub.f32 %v542, %v543
        %v545 = vand.u32 %v544, 4294901760
        %546 = vmatpush1.msra.mxu0 %v545
        %547 = vmatprep.subr.mxu0 0.0
        %v548 = vand.u32 %v233, 4294901760
        %v549 = vsub.f32 %v233, %v548
        %v550 = vand.u32 %v549, 4294901760
        %v551 = vsub.f32 %v549, %v550
        %v552 = vand.u32 %v551, 4294901760
        %553 = vmatpush1.msra.mxu0 %v552
        %554 = vmatprep.subr.mxu0 0.0
        %v555 = vand.u32 %v232, 4294901760
        %v556 = vsub.f32 %v232, %v555
        %v557 = vand.u32 %v556, 4294901760
        %v558 = vsub.f32 %v556, %v557
        %v559 = vand.u32 %v558, 4294901760
        %560 = vmatpush1.msra.mxu0 %v559
        %561 = vmatprep.subr.mxu0 0.0
        %v562 = vand.u32 %v231, 4294901760
        %v563 = vsub.f32 %v231, %v562
        %v564 = vand.u32 %v563, 4294901760
        %v565 = vsub.f32 %v563, %v564
        %v566 = vand.u32 %v565, 4294901760
        %567 = vmatpush1.msra.mxu0 %v566
        %568 = vmatprep.subr.mxu0 0.0
        %v569 = vand.u32 %v230, 4294901760
        %v570 = vsub.f32 %v230, %v569
        %v571 = vand.u32 %v570, 4294901760
        %v572 = vsub.f32 %v570, %v571
        %v573 = vand.u32 %v572, 4294901760
        %574 = vmatpush1.msra.mxu0 %v573
        %575 = vmatprep.subr.mxu0 0.0
        %v576 = vand.u32 %v229, 4294901760
        %v577 = vsub.f32 %v229, %v576
        %v578 = vand.u32 %v577, 4294901760
        %v579 = vsub.f32 %v577, %v578
        %v580 = vand.u32 %v579, 4294901760
        %581 = vmatpush1.msra.mxu0 %v580
        %582 = vmatprep.subr.mxu0 0.0
        %v583 = vand.u32 %v228, 4294901760
        %v584 = vsub.f32 %v228, %v583
        %v585 = vand.u32 %v584, 4294901760
        %v586 = vsub.f32 %v584, %v585
        %v587 = vand.u32 %v586, 4294901760
        %588 = vmatpush1.msra.mxu0 %v587
        %589 = vmatprep.subr.mxu0 0.0
        %v590 = vand.u32 %v227, 4294901760
        %v591 = vsub.f32 %v227, %v590
        %v592 = vand.u32 %v591, 4294901760
        %v593 = vsub.f32 %v591, %v592
        %v594 = vand.u32 %v593, 4294901760
        %595 = vmatpush1.msra.mxu0 %v594
        %596 = vmatprep.subr.mxu0 0.0
        %597 = vmatpush2.msra.mxu0 0.0
        %598 = vmatprep.subr.mxu0 0.0
        %599 = vmatpush2.msra.mxu0 0.0
        %600 = vmatprep.subr.mxu0 0.0
        %601 = vmatpush2.msra.mxu0 0.0
        %602 = vmatprep.subr.mxu0 0.0
        %603 = vmatpush2.msra.mxu0 0.0
        %604 = vmatprep.subr.mxu0 0.0
        %605 = vmatpush2.msra.mxu0 0.0
        %606 = vmatprep.subr.mxu0 0.0
        %607 = vmatpush2.msra.mxu0 0.0
        %608 = vmatprep.subr.mxu0 0.0
        %609 = vmatpush2.msra.mxu0 0.0
        %610 = vmatprep.subr.mxu0 0.0
        %611 = vmatpush2.msra.mxu0 0.0
        %612 = vmatprep.subr.mxu0 0.0
        %613 = vmatpush2.msra.mxu0 0.0
        %614 = vmatprep.subr.mxu0 0.0
        %615 = vmatpush2.msra.mxu0 0.0
        %616 = vmatprep.subr.mxu0 0.0
        %617 = vmatpush2.msra.mxu0 0.0
        %618 = vmatprep.subr.mxu0 0.0
        %619 = vmatpush2.msra.mxu0 0.0
        %620 = vmatprep.subr.mxu0 0.0
        %621 = vmatpush2.msra.mxu0 0.0
        %622 = vmatprep.subr.mxu0 0.0
        %623 = vmatpush2.msra.mxu0 0.0
        %624 = vmatprep.subr.mxu0 0.0
        %625 = vmatpush2.msra.mxu0 0.0
        %626 = vmatprep.subr.mxu0 0.0
        %627 = vmatpush2.msra.mxu0 0.0
        %628 = vmatprep.mubr.f32.mxu0 0.0
        %v629 = vand.u32 %v211, 4294901760
        %630 = vmatmul.mubr.f32.gmra.mxu0 %v629
        %v631 = vpop.f32.mrf.mxu0
        %v632 = vadd.f32 %v331, %v631
        %v633 = vpop.f32.mrf.mxu0
        %634 = vmatprep.mubr.f32.mxu0 0.0
        %v635 = vand.u32 %v212, 4294901760
        %636 = vmatmul.mubr.f32.gmra.mxu0 %v635
        %v637 = vpop.f32.mrf.mxu0
        %v638 = vadd.f32 %v341, %v637
        %v639 = vpop.f32.mrf.mxu0
        %640 = vmatprep.mubr.f32.mxu0 0.0
        %v641 = vand.u32 %v213, 4294901760
        %642 = vmatmul.mubr.f32.gmra.mxu0 %v641
        %v643 = vpop.f32.mrf.mxu0
        %v644 = vadd.f32 %v351, %v643
        %v645 = vpop.f32.mrf.mxu0
        %646 = vmatprep.mubr.f32.mxu0 0.0
        %v647 = vand.u32 %v214, 4294901760
        %648 = vmatmul.mubr.f32.gmra.mxu0 %v647
        %v649 = vpop.f32.mrf.mxu0
        %v650 = vadd.f32 %v361, %v649
        %v651 = vpop.f32.mrf.mxu0
        %652 = vmatprep.mubr.f32.mxu0 0.0
        %v653 = vand.u32 %v215, 4294901760
        %654 = vmatmul.mubr.f32.gmra.mxu0 %v653
        %v655 = vpop.f32.mrf.mxu0
        %v656 = vadd.f32 %v371, %v655
        %v657 = vpop.f32.mrf.mxu0
        %658 = vmatprep.mubr.f32.mxu0 0.0
        %v659 = vand.u32 %v216, 4294901760
        %660 = vmatmul.mubr.f32.gmra.mxu0 %v659
        %v661 = vpop.f32.mrf.mxu0
        %v662 = vadd.f32 %v381, %v661
        %v663 = vpop.f32.mrf.mxu0
        %664 = vmatprep.mubr.f32.mxu0 0.0
        %v665 = vand.u32 %v217, 4294901760
        %666 = vmatmul.mubr.f32.gmra.mxu0 %v665
        %v667 = vpop.f32.mrf.mxu0
        %v668 = vadd.f32 %v391, %v667
        %v669 = vpop.f32.mrf.mxu0
        %670 = vmatprep.mubr.f32.mxu0 0.0
        %v671 = vand.u32 %v218, 4294901760
        %672 = vmatmul.mubr.f32.gmra.mxu0 %v671
        %v673 = vpop.f32.mrf.mxu0
        %v674 = vadd.f32 %v401, %v673
        %v675 = vpop.f32.mrf.mxu0
        %676 = vmatprep.mubr.f32.mxu0 0.0
        %v677 = vand.u32 %v219, 4294901760
        %678 = vmatmul.mubr.f32.gmra.mxu0 %v677
        %v679 = vpop.f32.mrf.mxu0
        %v680 = vadd.f32 %v411, %v679
        %v681 = vpop.f32.mrf.mxu0
        %682 = vmatprep.mubr.f32.mxu0 0.0
        %v683 = vand.u32 %v220, 4294901760
        %684 = vmatmul.mubr.f32.gmra.mxu0 %v683
        %v685 = vpop.f32.mrf.mxu0
        %v686 = vadd.f32 %v421, %v685
        %v687 = vpop.f32.mrf.mxu0
        %688 = vmatprep.mubr.f32.mxu0 0.0
        %v689 = vand.u32 %v221, 4294901760
        %690 = vmatmul.mubr.f32.gmra.mxu0 %v689
        %v691 = vpop.f32.mrf.mxu0
        %v692 = vadd.f32 %v431, %v691
        %v693 = vpop.f32.mrf.mxu0
        %694 = vmatprep.mubr.f32.mxu0 0.0
        %v695 = vand.u32 %v222, 4294901760
        %696 = vmatmul.mubr.f32.gmra.mxu0 %v695
        %v697 = vpop.f32.mrf.mxu0
        %v698 = vadd.f32 %v441, %v697
        %v699 = vpop.f32.mrf.mxu0
        %700 = vmatprep.mubr.f32.mxu0 0.0
        %v701 = vand.u32 %v223, 4294901760
        %702 = vmatmul.mubr.f32.gmra.mxu0 %v701
        %v703 = vpop.f32.mrf.mxu0
        %v704 = vadd.f32 %v451, %v703
        %v705 = vpop.f32.mrf.mxu0
        %706 = vmatprep.mubr.f32.mxu0 0.0
        %v707 = vand.u32 %v224, 4294901760
        %708 = vmatmul.mubr.f32.gmra.mxu0 %v707
        %v709 = vpop.f32.mrf.mxu0
        %v710 = vadd.f32 %v461, %v709
        %v711 = vpop.f32.mrf.mxu0
        %712 = vmatprep.mubr.f32.mxu0 0.0
        %v713 = vand.u32 %v225, 4294901760
        %714 = vmatmul.mubr.f32.gmra.mxu0 %v713
        %v715 = vpop.f32.mrf.mxu0
        %v716 = vadd.f32 %v471, %v715
        %v717 = vpop.f32.mrf.mxu0
        %718 = vmatprep.mubr.f32.mxu0 0.0
        %v719 = vand.u32 %v226, 4294901760
        %720 = vmatmul.mubr.f32.gmra.mxu0 %v719
        %v721 = vpop.f32.mrf.mxu0
        %v722 = vadd.f32 %v481, %v721
        %v723 = vpop.f32.mrf.mxu0
        %724 = vdwg.mxu0
        %725 = vmatprep.subr.mxu0 0.0
        %v726 = vand.u32 %v242, 4294901760
        %v727 = vsub.f32 %v242, %v726
        %728 = vmatpush1.msra.mxu0 %v727
        %729 = vmatprep.subr.mxu0 0.0
        %v730 = vand.u32 %v241, 4294901760
        %v731 = vsub.f32 %v241, %v730
        %732 = vmatpush1.msra.mxu0 %v731
        %733 = vmatprep.subr.mxu0 0.0
        %v734 = vand.u32 %v240, 4294901760
        %v735 = vsub.f32 %v240, %v734
        %736 = vmatpush1.msra.mxu0 %v735
        %737 = vmatprep.subr.mxu0 0.0
        %v738 = vand.u32 %v239, 4294901760
        %v739 = vsub.f32 %v239, %v738
        %740 = vmatpush1.msra.mxu0 %v739
        %741 = vmatprep.subr.mxu0 0.0
        %v742 = vand.u32 %v238, 4294901760
        %v743 = vsub.f32 %v238, %v742
        %744 = vmatpush1.msra.mxu0 %v743
        %745 = vmatprep.subr.mxu0 0.0
        %v746 = vand.u32 %v237, 4294901760
        %v747 = vsub.f32 %v237, %v746
        %748 = vmatpush1.msra.mxu0 %v747
        %749 = vmatprep.subr.mxu0 0.0
        %v750 = vand.u32 %v236, 4294901760
        %v751 = vsub.f32 %v236, %v750
        %752 = vmatpush1.msra.mxu0 %v751
        %753 = vmatprep.subr.mxu0 0.0
        %v754 = vand.u32 %v235, 4294901760
        %v755 = vsub.f32 %v235, %v754
        %756 = vmatpush1.msra.mxu0 %v755
        %757 = vmatprep.subr.mxu0 0.0
        %v758 = vand.u32 %v234, 4294901760
        %v759 = vsub.f32 %v234, %v758
        %760 = vmatpush1.msra.mxu0 %v759
        %761 = vmatprep.subr.mxu0 0.0
        %v762 = vand.u32 %v233, 4294901760
        %v763 = vsub.f32 %v233, %v762
        %764 = vmatpush1.msra.mxu0 %v763
        %765 = vmatprep.subr.mxu0 0.0
        %v766 = vand.u32 %v232, 4294901760
        %v767 = vsub.f32 %v232, %v766
        %768 = vmatpush1.msra.mxu0 %v767
        %769 = vmatprep.subr.mxu0 0.0
        %v770 = vand.u32 %v231, 4294901760
        %v771 = vsub.f32 %v231, %v770
        %772 = vmatpush1.msra.mxu0 %v771
        %773 = vmatprep.subr.mxu0 0.0
        %v774 = vand.u32 %v230, 4294901760
        %v775 = vsub.f32 %v230, %v774
        %776 = vmatpush1.msra.mxu0 %v775
        %777 = vmatprep.subr.mxu0 0.0
        %v778 = vand.u32 %v229, 4294901760
        %v779 = vsub.f32 %v229, %v778
        %780 = vmatpush1.msra.mxu0 %v779
        %781 = vmatprep.subr.mxu0 0.0
        %v782 = vand.u32 %v228, 4294901760
        %v783 = vsub.f32 %v228, %v782
        %784 = vmatpush1.msra.mxu0 %v783
        %785 = vmatprep.subr.mxu0 0.0
        %v786 = vand.u32 %v227, 4294901760
        %v787 = vsub.f32 %v227, %v786
        %788 = vmatpush1.msra.mxu0 %v787
        %789 = vmatprep.subr.mxu0 0.0
        %790 = vmatpush2.msra.mxu0 0.0
        %791 = vmatprep.subr.mxu0 0.0
        %792 = vmatpush2.msra.mxu0 0.0
        %793 = vmatprep.subr.mxu0 0.0
        %794 = vmatpush2.msra.mxu0 0.0
        %795 = vmatprep.subr.mxu0 0.0
        %796 = vmatpush2.msra.mxu0 0.0
        %797 = vmatprep.subr.mxu0 0.0
        %798 = vmatpush2.msra.mxu0 0.0
        %799 = vmatprep.subr.mxu0 0.0
        %800 = vmatpush2.msra.mxu0 0.0
        %801 = vmatprep.subr.mxu0 0.0
        %802 = vmatpush2.msra.mxu0 0.0
        %803 = vmatprep.subr.mxu0 0.0
        %804 = vmatpush2.msra.mxu0 0.0
        %805 = vmatprep.subr.mxu0 0.0
        %806 = vmatpush2.msra.mxu0 0.0
        %807 = vmatprep.subr.mxu0 0.0
        %808 = vmatpush2.msra.mxu0 0.0
        %809 = vmatprep.subr.mxu0 0.0
        %810 = vmatpush2.msra.mxu0 0.0
        %811 = vmatprep.subr.mxu0 0.0
        %812 = vmatpush2.msra.mxu0 0.0
        %813 = vmatprep.subr.mxu0 0.0
        %814 = vmatpush2.msra.mxu0 0.0
        %815 = vmatprep.subr.mxu0 0.0
        %816 = vmatpush2.msra.mxu0 0.0
        %817 = vmatprep.subr.mxu0 0.0
        %818 = vmatpush2.msra.mxu0 0.0
        %819 = vmatprep.subr.mxu0 0.0
        %820 = vmatpush2.msra.mxu0 0.0
        %821 = vmatprep.mubr.f32.mxu0 0.0
        %v822 = vand.u32 %v211, 4294901760
        %v823 = vsub.f32 %v211, %v822
        %824 = vmatmul.mubr.f32.gmra.mxu0 %v823
        %v825 = vpop.f32.mrf.mxu0
        %v826 = vadd.f32 %v632, %v825
        %v827 = vpop.f32.mrf.mxu0
        %828 = vmatprep.mubr.f32.mxu0 0.0
        %v829 = vand.u32 %v212, 4294901760
        %v830 = vsub.f32 %v212, %v829
        %831 = vmatmul.mubr.f32.gmra.mxu0 %v830
        %v832 = vpop.f32.mrf.mxu0
        %v833 = vadd.f32 %v638, %v832
        %v834 = vpop.f32.mrf.mxu0
        %835 = vmatprep.mubr.f32.mxu0 0.0
        %v836 = vand.u32 %v213, 4294901760
        %v837 = vsub.f32 %v213, %v836
        %838 = vmatmul.mubr.f32.gmra.mxu0 %v837
        %v839 = vpop.f32.mrf.mxu0
        %v840 = vadd.f32 %v644, %v839
        %v841 = vpop.f32.mrf.mxu0
        %842 = vmatprep.mubr.f32.mxu0 0.0
        %v843 = vand.u32 %v214, 4294901760
        %v844 = vsub.f32 %v214, %v843
        %845 = vmatmul.mubr.f32.gmra.mxu0 %v844
        %v846 = vpop.f32.mrf.mxu0
        %v847 = vadd.f32 %v650, %v846
        %v848 = vpop.f32.mrf.mxu0
        %849 = vmatprep.mubr.f32.mxu0 0.0
        %v850 = vand.u32 %v215, 4294901760
        %v851 = vsub.f32 %v215, %v850
        %852 = vmatmul.mubr.f32.gmra.mxu0 %v851
        %v853 = vpop.f32.mrf.mxu0
        %v854 = vadd.f32 %v656, %v853
        %v855 = vpop.f32.mrf.mxu0
        %856 = vmatprep.mubr.f32.mxu0 0.0
        %v857 = vand.u32 %v216, 4294901760
        %v858 = vsub.f32 %v216, %v857
        %859 = vmatmul.mubr.f32.gmra.mxu0 %v858
        %v860 = vpop.f32.mrf.mxu0
        %v861 = vadd.f32 %v662, %v860
        %v862 = vpop.f32.mrf.mxu0
        %863 = vmatprep.mubr.f32.mxu0 0.0
        %v864 = vand.u32 %v217, 4294901760
        %v865 = vsub.f32 %v217, %v864
        %866 = vmatmul.mubr.f32.gmra.mxu0 %v865
        %v867 = vpop.f32.mrf.mxu0
        %v868 = vadd.f32 %v668, %v867
        %v869 = vpop.f32.mrf.mxu0
        %870 = vmatprep.mubr.f32.mxu0 0.0
        %v871 = vand.u32 %v218, 4294901760
        %v872 = vsub.f32 %v218, %v871
        %873 = vmatmul.mubr.f32.gmra.mxu0 %v872
        %v874 = vpop.f32.mrf.mxu0
        %v875 = vadd.f32 %v674, %v874
        %v876 = vpop.f32.mrf.mxu0
        %877 = vmatprep.mubr.f32.mxu0 0.0
        %v878 = vand.u32 %v219, 4294901760
        %v879 = vsub.f32 %v219, %v878
        %880 = vmatmul.mubr.f32.gmra.mxu0 %v879
        %v881 = vpop.f32.mrf.mxu0
        %v882 = vadd.f32 %v680, %v881
        %v883 = vpop.f32.mrf.mxu0
        %884 = vmatprep.mubr.f32.mxu0 0.0
        %v885 = vand.u32 %v220, 4294901760
        %v886 = vsub.f32 %v220, %v885
        %887 = vmatmul.mubr.f32.gmra.mxu0 %v886
        %v888 = vpop.f32.mrf.mxu0
        %v889 = vadd.f32 %v686, %v888
        %v890 = vpop.f32.mrf.mxu0
        %891 = vmatprep.mubr.f32.mxu0 0.0
        %v892 = vand.u32 %v221, 4294901760
        %v893 = vsub.f32 %v221, %v892
        %894 = vmatmul.mubr.f32.gmra.mxu0 %v893
        %v895 = vpop.f32.mrf.mxu0
        %v896 = vadd.f32 %v692, %v895
        %v897 = vpop.f32.mrf.mxu0
        %898 = vmatprep.mubr.f32.mxu0 0.0
        %v899 = vand.u32 %v222, 4294901760
        %v900 = vsub.f32 %v222, %v899
        %901 = vmatmul.mubr.f32.gmra.mxu0 %v900
        %v902 = vpop.f32.mrf.mxu0
        %v903 = vadd.f32 %v698, %v902
        %v904 = vpop.f32.mrf.mxu0
        %905 = vmatprep.mubr.f32.mxu0 0.0
        %v906 = vand.u32 %v223, 4294901760
        %v907 = vsub.f32 %v223, %v906
        %908 = vmatmul.mubr.f32.gmra.mxu0 %v907
        %v909 = vpop.f32.mrf.mxu0
        %v910 = vadd.f32 %v704, %v909
        %v911 = vpop.f32.mrf.mxu0
        %912 = vmatprep.mubr.f32.mxu0 0.0
        %v913 = vand.u32 %v224, 4294901760
        %v914 = vsub.f32 %v224, %v913
        %915 = vmatmul.mubr.f32.gmra.mxu0 %v914
        %v916 = vpop.f32.mrf.mxu0
        %v917 = vadd.f32 %v710, %v916
        %v918 = vpop.f32.mrf.mxu0
        %919 = vmatprep.mubr.f32.mxu0 0.0
        %v920 = vand.u32 %v225, 4294901760
        %v921 = vsub.f32 %v225, %v920
        %922 = vmatmul.mubr.f32.gmra.mxu0 %v921
        %v923 = vpop.f32.mrf.mxu0
        %v924 = vadd.f32 %v716, %v923
        %v925 = vpop.f32.mrf.mxu0
        %926 = vmatprep.mubr.f32.mxu0 0.0
        %v927 = vand.u32 %v226, 4294901760
        %v928 = vsub.f32 %v226, %v927
        %929 = vmatmul.mubr.f32.gmra.mxu0 %v928
        %v930 = vpop.f32.mrf.mxu0
        %v931 = vadd.f32 %v722, %v930
        %v932 = vpop.f32.mrf.mxu0
        %933 = vdwg.mxu0
        %934 = vmatprep.subr.mxu0 0.0
        %v935 = vand.u32 %v242, 4294901760
        %936 = vmatpush1.msra.mxu0 %v935
        %937 = vmatprep.subr.mxu0 0.0
        %v938 = vand.u32 %v241, 4294901760
        %939 = vmatpush1.msra.mxu0 %v938
        %940 = vmatprep.subr.mxu0 0.0
        %v941 = vand.u32 %v240, 4294901760
        %942 = vmatpush1.msra.mxu0 %v941
        %943 = vmatprep.subr.mxu0 0.0
        %v944 = vand.u32 %v239, 4294901760
        %945 = vmatpush1.msra.mxu0 %v944
        %946 = vmatprep.subr.mxu0 0.0
        %v947 = vand.u32 %v238, 4294901760
        %948 = vmatpush1.msra.mxu0 %v947
        %949 = vmatprep.subr.mxu0 0.0
        %v950 = vand.u32 %v237, 4294901760
        %951 = vmatpush1.msra.mxu0 %v950
        %952 = vmatprep.subr.mxu0 0.0
        %v953 = vand.u32 %v236, 4294901760
        %954 = vmatpush1.msra.mxu0 %v953
        %955 = vmatprep.subr.mxu0 0.0
        %v956 = vand.u32 %v235, 4294901760
        %957 = vmatpush1.msra.mxu0 %v956
        %958 = vmatprep.subr.mxu0 0.0
        %v959 = vand.u32 %v234, 4294901760
        %960 = vmatpush1.msra.mxu0 %v959
        %961 = vmatprep.subr.mxu0 0.0
        %v962 = vand.u32 %v233, 4294901760
        %963 = vmatpush1.msra.mxu0 %v962
        %964 = vmatprep.subr.mxu0 0.0
        %v965 = vand.u32 %v232, 4294901760
        %966 = vmatpush1.msra.mxu0 %v965
        %967 = vmatprep.subr.mxu0 0.0
        %v968 = vand.u32 %v231, 4294901760
        %969 = vmatpush1.msra.mxu0 %v968
        %970 = vmatprep.subr.mxu0 0.0
        %v971 = vand.u32 %v230, 4294901760
        %972 = vmatpush1.msra.mxu0 %v971
        %973 = vmatprep.subr.mxu0 0.0
        %v974 = vand.u32 %v229, 4294901760
        %975 = vmatpush1.msra.mxu0 %v974
        %976 = vmatprep.subr.mxu0 0.0
        %v977 = vand.u32 %v228, 4294901760
        %978 = vmatpush1.msra.mxu0 %v977
        %979 = vmatprep.subr.mxu0 0.0
        %v980 = vand.u32 %v227, 4294901760
        %981 = vmatpush1.msra.mxu0 %v980
        %982 = vmatprep.subr.mxu0 0.0
        %983 = vmatpush2.msra.mxu0 0.0
        %984 = vmatprep.subr.mxu0 0.0
        %985 = vmatpush2.msra.mxu0 0.0
        %986 = vmatprep.subr.mxu0 0.0
        %987 = vmatpush2.msra.mxu0 0.0
        %988 = vmatprep.subr.mxu0 0.0
        %989 = vmatpush2.msra.mxu0 0.0
        %990 = vmatprep.subr.mxu0 0.0
        %991 = vmatpush2.msra.mxu0 0.0
        %992 = vmatprep.subr.mxu0 0.0
        %993 = vmatpush2.msra.mxu0 0.0
        %994 = vmatprep.subr.mxu0 0.0
        %995 = vmatpush2.msra.mxu0 0.0
        %996 = vmatprep.subr.mxu0 0.0
        %997 = vmatpush2.msra.mxu0 0.0
        %998 = vmatprep.subr.mxu0 0.0
        %999 = vmatpush2.msra.mxu0 0.0
        %1000 = vmatprep.subr.mxu0 0.0
        %1001 = vmatpush2.msra.mxu0 0.0
        %1002 = vmatprep.subr.mxu0 0.0
        %1003 = vmatpush2.msra.mxu0 0.0
        %1004 = vmatprep.subr.mxu0 0.0
        %1005 = vmatpush2.msra.mxu0 0.0
        %1006 = vmatprep.subr.mxu0 0.0
        %1007 = vmatpush2.msra.mxu0 0.0
        %1008 = vmatprep.subr.mxu0 0.0
        %1009 = vmatpush2.msra.mxu0 0.0
        %1010 = vmatprep.subr.mxu0 0.0
        %1011 = vmatpush2.msra.mxu0 0.0
        %1012 = vmatprep.subr.mxu0 0.0
        %1013 = vmatpush2.msra.mxu0 0.0
        %1014 = vmatprep.mubr.f32.mxu0 0.0
        %v1015 = vand.u32 %v211, 4294901760
        %v1016 = vsub.f32 %v211, %v1015
        %v1017 = vand.u32 %v1016, 4294901760
        %1018 = vmatmul.mubr.f32.gmra.mxu0 %v1017
        %v1019 = vpop.f32.mrf.mxu0
        %v1020 = vadd.f32 %v826, %v1019
        %v1021 = vpop.f32.mrf.mxu0
        %1022 = vmatprep.mubr.f32.mxu0 0.0
        %v1023 = vand.u32 %v212, 4294901760
        %v1024 = vsub.f32 %v212, %v1023
        %v1025 = vand.u32 %v1024, 4294901760
        %1026 = vmatmul.mubr.f32.gmra.mxu0 %v1025
        %v1027 = vpop.f32.mrf.mxu0
        %v1028 = vadd.f32 %v833, %v1027
        %v1029 = vpop.f32.mrf.mxu0
        %1030 = vmatprep.mubr.f32.mxu0 0.0
        %v1031 = vand.u32 %v213, 4294901760
        %v1032 = vsub.f32 %v213, %v1031
        %v1033 = vand.u32 %v1032, 4294901760
        %1034 = vmatmul.mubr.f32.gmra.mxu0 %v1033
        %v1035 = vpop.f32.mrf.mxu0
        %v1036 = vadd.f32 %v840, %v1035
        %v1037 = vpop.f32.mrf.mxu0
        %1038 = vmatprep.mubr.f32.mxu0 0.0
        %v1039 = vand.u32 %v214, 4294901760
        %v1040 = vsub.f32 %v214, %v1039
        %v1041 = vand.u32 %v1040, 4294901760
        %1042 = vmatmul.mubr.f32.gmra.mxu0 %v1041
        %v1043 = vpop.f32.mrf.mxu0
        %v1044 = vadd.f32 %v847, %v1043
        %v1045 = vpop.f32.mrf.mxu0
        %1046 = vmatprep.mubr.f32.mxu0 0.0
        %v1047 = vand.u32 %v215, 4294901760
        %v1048 = vsub.f32 %v215, %v1047
        %v1049 = vand.u32 %v1048, 4294901760
        %1050 = vmatmul.mubr.f32.gmra.mxu0 %v1049
        %v1051 = vpop.f32.mrf.mxu0
        %v1052 = vadd.f32 %v854, %v1051
        %v1053 = vpop.f32.mrf.mxu0
        %1054 = vmatprep.mubr.f32.mxu0 0.0
        %v1055 = vand.u32 %v216, 4294901760
        %v1056 = vsub.f32 %v216, %v1055
        %v1057 = vand.u32 %v1056, 4294901760
        %1058 = vmatmul.mubr.f32.gmra.mxu0 %v1057
        %v1059 = vpop.f32.mrf.mxu0
        %v1060 = vadd.f32 %v861, %v1059
        %v1061 = vpop.f32.mrf.mxu0
        %1062 = vmatprep.mubr.f32.mxu0 0.0
        %v1063 = vand.u32 %v217, 4294901760
        %v1064 = vsub.f32 %v217, %v1063
        %v1065 = vand.u32 %v1064, 4294901760
        %1066 = vmatmul.mubr.f32.gmra.mxu0 %v1065
        %v1067 = vpop.f32.mrf.mxu0
        %v1068 = vadd.f32 %v868, %v1067
        %v1069 = vpop.f32.mrf.mxu0
        %1070 = vmatprep.mubr.f32.mxu0 0.0
        %v1071 = vand.u32 %v218, 4294901760
        %v1072 = vsub.f32 %v218, %v1071
        %v1073 = vand.u32 %v1072, 4294901760
        %1074 = vmatmul.mubr.f32.gmra.mxu0 %v1073
        %v1075 = vpop.f32.mrf.mxu0
        %v1076 = vadd.f32 %v875, %v1075
        %v1077 = vpop.f32.mrf.mxu0
        %1078 = vmatprep.mubr.f32.mxu0 0.0
        %v1079 = vand.u32 %v219, 4294901760
        %v1080 = vsub.f32 %v219, %v1079
        %v1081 = vand.u32 %v1080, 4294901760
        %1082 = vmatmul.mubr.f32.gmra.mxu0 %v1081
        %v1083 = vpop.f32.mrf.mxu0
        %v1084 = vadd.f32 %v882, %v1083
        %v1085 = vpop.f32.mrf.mxu0
        %1086 = vmatprep.mubr.f32.mxu0 0.0
        %v1087 = vand.u32 %v220, 4294901760
        %v1088 = vsub.f32 %v220, %v1087
        %v1089 = vand.u32 %v1088, 4294901760
        %1090 = vmatmul.mubr.f32.gmra.mxu0 %v1089
        %v1091 = vpop.f32.mrf.mxu0
        %v1092 = vadd.f32 %v889, %v1091
        %v1093 = vpop.f32.mrf.mxu0
        %1094 = vmatprep.mubr.f32.mxu0 0.0
        %v1095 = vand.u32 %v221, 4294901760
        %v1096 = vsub.f32 %v221, %v1095
        %v1097 = vand.u32 %v1096, 4294901760
        %1098 = vmatmul.mubr.f32.gmra.mxu0 %v1097
        %v1099 = vpop.f32.mrf.mxu0
        %v1100 = vadd.f32 %v896, %v1099
        %v1101 = vpop.f32.mrf.mxu0
        %1102 = vmatprep.mubr.f32.mxu0 0.0
        %v1103 = vand.u32 %v222, 4294901760
        %v1104 = vsub.f32 %v222, %v1103
        %v1105 = vand.u32 %v1104, 4294901760
        %1106 = vmatmul.mubr.f32.gmra.mxu0 %v1105
        %v1107 = vpop.f32.mrf.mxu0
        %v1108 = vadd.f32 %v903, %v1107
        %v1109 = vpop.f32.mrf.mxu0
        %1110 = vmatprep.mubr.f32.mxu0 0.0
        %v1111 = vand.u32 %v223, 4294901760
        %v1112 = vsub.f32 %v223, %v1111
        %v1113 = vand.u32 %v1112, 4294901760
        %1114 = vmatmul.mubr.f32.gmra.mxu0 %v1113
        %v1115 = vpop.f32.mrf.mxu0
        %v1116 = vadd.f32 %v910, %v1115
        %v1117 = vpop.f32.mrf.mxu0
        %1118 = vmatprep.mubr.f32.mxu0 0.0
        %v1119 = vand.u32 %v224, 4294901760
        %v1120 = vsub.f32 %v224, %v1119
        %v1121 = vand.u32 %v1120, 4294901760
        %1122 = vmatmul.mubr.f32.gmra.mxu0 %v1121
        %v1123 = vpop.f32.mrf.mxu0
        %v1124 = vadd.f32 %v917, %v1123
        %v1125 = vpop.f32.mrf.mxu0
        %1126 = vmatprep.mubr.f32.mxu0 0.0
        %v1127 = vand.u32 %v225, 4294901760
        %v1128 = vsub.f32 %v225, %v1127
        %v1129 = vand.u32 %v1128, 4294901760
        %1130 = vmatmul.mubr.f32.gmra.mxu0 %v1129
        %v1131 = vpop.f32.mrf.mxu0
        %v1132 = vadd.f32 %v924, %v1131
        %v1133 = vpop.f32.mrf.mxu0
        %1134 = vmatprep.mubr.f32.mxu0 0.0
        %v1135 = vand.u32 %v226, 4294901760
        %v1136 = vsub.f32 %v226, %v1135
        %v1137 = vand.u32 %v1136, 4294901760
        %1138 = vmatmul.mubr.f32.gmra.mxu0 %v1137
        %v1139 = vpop.f32.mrf.mxu0
        %v1140 = vadd.f32 %v931, %v1139
        %v1141 = vpop.f32.mrf.mxu0
        %1142 = vdwg.mxu0
        %1143 = vmatprep.subr.mxu0 0.0
        %v1144 = vand.u32 %v242, 4294901760
        %v1145 = vsub.f32 %v242, %v1144
        %v1146 = vand.u32 %v1145, 4294901760
        %1147 = vmatpush1.msra.mxu0 %v1146
        %1148 = vmatprep.subr.mxu0 0.0
        %v1149 = vand.u32 %v241, 4294901760
        %v1150 = vsub.f32 %v241, %v1149
        %v1151 = vand.u32 %v1150, 4294901760
        %1152 = vmatpush1.msra.mxu0 %v1151
        %1153 = vmatprep.subr.mxu0 0.0
        %v1154 = vand.u32 %v240, 4294901760
        %v1155 = vsub.f32 %v240, %v1154
        %v1156 = vand.u32 %v1155, 4294901760
        %1157 = vmatpush1.msra.mxu0 %v1156
        %1158 = vmatprep.subr.mxu0 0.0
        %v1159 = vand.u32 %v239, 4294901760
        %v1160 = vsub.f32 %v239, %v1159
        %v1161 = vand.u32 %v1160, 4294901760
        %1162 = vmatpush1.msra.mxu0 %v1161
        %1163 = vmatprep.subr.mxu0 0.0
        %v1164 = vand.u32 %v238, 4294901760
        %v1165 = vsub.f32 %v238, %v1164
        %v1166 = vand.u32 %v1165, 4294901760
        %1167 = vmatpush1.msra.mxu0 %v1166
        %1168 = vmatprep.subr.mxu0 0.0
        %v1169 = vand.u32 %v237, 4294901760
        %v1170 = vsub.f32 %v237, %v1169
        %v1171 = vand.u32 %v1170, 4294901760
        %1172 = vmatpush1.msra.mxu0 %v1171
        %1173 = vmatprep.subr.mxu0 0.0
        %v1174 = vand.u32 %v236, 4294901760
        %v1175 = vsub.f32 %v236, %v1174
        %v1176 = vand.u32 %v1175, 4294901760
        %1177 = vmatpush1.msra.mxu0 %v1176
        %1178 = vmatprep.subr.mxu0 0.0
        %v1179 = vand.u32 %v235, 4294901760
        %v1180 = vsub.f32 %v235, %v1179
        %v1181 = vand.u32 %v1180, 4294901760
        %1182 = vmatpush1.msra.mxu0 %v1181
        %1183 = vmatprep.subr.mxu0 0.0
        %v1184 = vand.u32 %v234, 4294901760
        %v1185 = vsub.f32 %v234, %v1184
        %v1186 = vand.u32 %v1185, 4294901760
        %1187 = vmatpush1.msra.mxu0 %v1186
        %1188 = vmatprep.subr.mxu0 0.0
        %v1189 = vand.u32 %v233, 4294901760
        %v1190 = vsub.f32 %v233, %v1189
        %v1191 = vand.u32 %v1190, 4294901760
        %1192 = vmatpush1.msra.mxu0 %v1191
        %1193 = vmatprep.subr.mxu0 0.0
        %v1194 = vand.u32 %v232, 4294901760
        %v1195 = vsub.f32 %v232, %v1194
        %v1196 = vand.u32 %v1195, 4294901760
        %1197 = vmatpush1.msra.mxu0 %v1196
        %1198 = vmatprep.subr.mxu0 0.0
        %v1199 = vand.u32 %v231, 4294901760
        %v1200 = vsub.f32 %v231, %v1199
        %v1201 = vand.u32 %v1200, 4294901760
        %1202 = vmatpush1.msra.mxu0 %v1201
        %1203 = vmatprep.subr.mxu0 0.0
        %v1204 = vand.u32 %v230, 4294901760
        %v1205 = vsub.f32 %v230, %v1204
        %v1206 = vand.u32 %v1205, 4294901760
        %1207 = vmatpush1.msra.mxu0 %v1206
        %1208 = vmatprep.subr.mxu0 0.0
        %v1209 = vand.u32 %v229, 4294901760
        %v1210 = vsub.f32 %v229, %v1209
        %v1211 = vand.u32 %v1210, 4294901760
        %1212 = vmatpush1.msra.mxu0 %v1211
        %1213 = vmatprep.subr.mxu0 0.0
        %v1214 = vand.u32 %v228, 4294901760
        %v1215 = vsub.f32 %v228, %v1214
        %v1216 = vand.u32 %v1215, 4294901760
        %1217 = vmatpush1.msra.mxu0 %v1216
        %1218 = vmatprep.subr.mxu0 0.0
        %v1219 = vand.u32 %v227, 4294901760
        %v1220 = vsub.f32 %v227, %v1219
        %v1221 = vand.u32 %v1220, 4294901760
        %1222 = vmatpush1.msra.mxu0 %v1221
        %1223 = vmatprep.subr.mxu0 0.0
        %1224 = vmatpush2.msra.mxu0 0.0
        %1225 = vmatprep.subr.mxu0 0.0
        %1226 = vmatpush2.msra.mxu0 0.0
        %1227 = vmatprep.subr.mxu0 0.0
        %1228 = vmatpush2.msra.mxu0 0.0
        %1229 = vmatprep.subr.mxu0 0.0
        %1230 = vmatpush2.msra.mxu0 0.0
        %1231 = vmatprep.subr.mxu0 0.0
        %1232 = vmatpush2.msra.mxu0 0.0
        %1233 = vmatprep.subr.mxu0 0.0
        %1234 = vmatpush2.msra.mxu0 0.0
        %1235 = vmatprep.subr.mxu0 0.0
        %1236 = vmatpush2.msra.mxu0 0.0
        %1237 = vmatprep.subr.mxu0 0.0
        %1238 = vmatpush2.msra.mxu0 0.0
        %1239 = vmatprep.subr.mxu0 0.0
        %1240 = vmatpush2.msra.mxu0 0.0
        %1241 = vmatprep.subr.mxu0 0.0
        %1242 = vmatpush2.msra.mxu0 0.0
        %1243 = vmatprep.subr.mxu0 0.0
        %1244 = vmatpush2.msra.mxu0 0.0
        %1245 = vmatprep.subr.mxu0 0.0
        %1246 = vmatpush2.msra.mxu0 0.0
        %1247 = vmatprep.subr.mxu0 0.0
        %1248 = vmatpush2.msra.mxu0 0.0
        %1249 = vmatprep.subr.mxu0 0.0
        %1250 = vmatpush2.msra.mxu0 0.0
        %1251 = vmatprep.subr.mxu0 0.0
        %1252 = vmatpush2.msra.mxu0 0.0
        %1253 = vmatprep.subr.mxu0 0.0
        %1254 = vmatpush2.msra.mxu0 0.0
        %1255 = vmatprep.mubr.f32.mxu0 0.0
        %v1256 = vand.u32 %v211, 4294901760
        %1257 = vmatmul.mubr.f32.gmra.mxu0 %v1256
        %v1258 = vpop.f32.mrf.mxu0
        %v1259 = vadd.f32 %v1020, %v1258
        %v1260 = vpop.f32.mrf.mxu0
        %1261 = vmatprep.mubr.f32.mxu0 0.0
        %v1262 = vand.u32 %v212, 4294901760
        %1263 = vmatmul.mubr.f32.gmra.mxu0 %v1262
        %v1264 = vpop.f32.mrf.mxu0
        %v1265 = vadd.f32 %v1028, %v1264
        %v1266 = vpop.f32.mrf.mxu0
        %1267 = vmatprep.mubr.f32.mxu0 0.0
        %v1268 = vand.u32 %v213, 4294901760
        %1269 = vmatmul.mubr.f32.gmra.mxu0 %v1268
        %v1270 = vpop.f32.mrf.mxu0
        %v1271 = vadd.f32 %v1036, %v1270
        %v1272 = vpop.f32.mrf.mxu0
        %1273 = vmatprep.mubr.f32.mxu0 0.0
        %v1274 = vand.u32 %v214, 4294901760
        %1275 = vmatmul.mubr.f32.gmra.mxu0 %v1274
        %v1276 = vpop.f32.mrf.mxu0
        %v1277 = vadd.f32 %v1044, %v1276
        %v1278 = vpop.f32.mrf.mxu0
        %1279 = vmatprep.mubr.f32.mxu0 0.0
        %v1280 = vand.u32 %v215, 4294901760
        %1281 = vmatmul.mubr.f32.gmra.mxu0 %v1280
        %v1282 = vpop.f32.mrf.mxu0
        %v1283 = vadd.f32 %v1052, %v1282
        %v1284 = vpop.f32.mrf.mxu0
        %1285 = vmatprep.mubr.f32.mxu0 0.0
        %v1286 = vand.u32 %v216, 4294901760
        %1287 = vmatmul.mubr.f32.gmra.mxu0 %v1286
        %v1288 = vpop.f32.mrf.mxu0
        %v1289 = vadd.f32 %v1060, %v1288
        %v1290 = vpop.f32.mrf.mxu0
        %1291 = vmatprep.mubr.f32.mxu0 0.0
        %v1292 = vand.u32 %v217, 4294901760
        %1293 = vmatmul.mubr.f32.gmra.mxu0 %v1292
        %v1294 = vpop.f32.mrf.mxu0
        %v1295 = vadd.f32 %v1068, %v1294
        %v1296 = vpop.f32.mrf.mxu0
        %1297 = vmatprep.mubr.f32.mxu0 0.0
        %v1298 = vand.u32 %v218, 4294901760
        %1299 = vmatmul.mubr.f32.gmra.mxu0 %v1298
        %v1300 = vpop.f32.mrf.mxu0
        %v1301 = vadd.f32 %v1076, %v1300
        %v1302 = vpop.f32.mrf.mxu0
        %1303 = vmatprep.mubr.f32.mxu0 0.0
        %v1304 = vand.u32 %v219, 4294901760
        %1305 = vmatmul.mubr.f32.gmra.mxu0 %v1304
        %v1306 = vpop.f32.mrf.mxu0
        %v1307 = vadd.f32 %v1084, %v1306
        %v1308 = vpop.f32.mrf.mxu0
        %1309 = vmatprep.mubr.f32.mxu0 0.0
        %v1310 = vand.u32 %v220, 4294901760
        %1311 = vmatmul.mubr.f32.gmra.mxu0 %v1310
        %v1312 = vpop.f32.mrf.mxu0
        %v1313 = vadd.f32 %v1092, %v1312
        %v1314 = vpop.f32.mrf.mxu0
        %1315 = vmatprep.mubr.f32.mxu0 0.0
        %v1316 = vand.u32 %v221, 4294901760
        %1317 = vmatmul.mubr.f32.gmra.mxu0 %v1316
        %v1318 = vpop.f32.mrf.mxu0
        %v1319 = vadd.f32 %v1100, %v1318
        %v1320 = vpop.f32.mrf.mxu0
        %1321 = vmatprep.mubr.f32.mxu0 0.0
        %v1322 = vand.u32 %v222, 4294901760
        %1323 = vmatmul.mubr.f32.gmra.mxu0 %v1322
        %v1324 = vpop.f32.mrf.mxu0
        %v1325 = vadd.f32 %v1108, %v1324
        %v1326 = vpop.f32.mrf.mxu0
        %1327 = vmatprep.mubr.f32.mxu0 0.0
        %v1328 = vand.u32 %v223, 4294901760
        %1329 = vmatmul.mubr.f32.gmra.mxu0 %v1328
        %v1330 = vpop.f32.mrf.mxu0
        %v1331 = vadd.f32 %v1116, %v1330
        %v1332 = vpop.f32.mrf.mxu0
        %1333 = vmatprep.mubr.f32.mxu0 0.0
        %v1334 = vand.u32 %v224, 4294901760
        %1335 = vmatmul.mubr.f32.gmra.mxu0 %v1334
        %v1336 = vpop.f32.mrf.mxu0
        %v1337 = vadd.f32 %v1124, %v1336
        %v1338 = vpop.f32.mrf.mxu0
        %1339 = vmatprep.mubr.f32.mxu0 0.0
        %v1340 = vand.u32 %v225, 4294901760
        %1341 = vmatmul.mubr.f32.gmra.mxu0 %v1340
        %v1342 = vpop.f32.mrf.mxu0
        %v1343 = vadd.f32 %v1132, %v1342
        %v1344 = vpop.f32.mrf.mxu0
        %1345 = vmatprep.mubr.f32.mxu0 0.0
        %v1346 = vand.u32 %v226, 4294901760
        %1347 = vmatmul.mubr.f32.gmra.mxu0 %v1346
        %v1348 = vpop.f32.mrf.mxu0
        %v1349 = vadd.f32 %v1140, %v1348
        %v1350 = vpop.f32.mrf.mxu0
        %1351 = vdwg.mxu0
        %1352 = vmatprep.subr.mxu0 0.0
        %v1353 = vand.u32 %v242, 4294901760
        %1354 = vmatpush1.msra.mxu0 %v1353
        %1355 = vmatprep.subr.mxu0 0.0
        %v1356 = vand.u32 %v241, 4294901760
        %1357 = vmatpush1.msra.mxu0 %v1356
        %1358 = vmatprep.subr.mxu0 0.0
        %v1359 = vand.u32 %v240, 4294901760
        %1360 = vmatpush1.msra.mxu0 %v1359
        %1361 = vmatprep.subr.mxu0 0.0
        %v1362 = vand.u32 %v239, 4294901760
        %1363 = vmatpush1.msra.mxu0 %v1362
        %1364 = vmatprep.subr.mxu0 0.0
        %v1365 = vand.u32 %v238, 4294901760
        %1366 = vmatpush1.msra.mxu0 %v1365
        %1367 = vmatprep.subr.mxu0 0.0
        %v1368 = vand.u32 %v237, 4294901760
        %1369 = vmatpush1.msra.mxu0 %v1368
        %1370 = vmatprep.subr.mxu0 0.0
        %v1371 = vand.u32 %v236, 4294901760
        %1372 = vmatpush1.msra.mxu0 %v1371
        %1373 = vmatprep.subr.mxu0 0.0
        %v1374 = vand.u32 %v235, 4294901760
        %1375 = vmatpush1.msra.mxu0 %v1374
        %1376 = vmatprep.subr.mxu0 0.0
        %v1377 = vand.u32 %v234, 4294901760
        %1378 = vmatpush1.msra.mxu0 %v1377
        %1379 = vmatprep.subr.mxu0 0.0
        %v1380 = vand.u32 %v233, 4294901760
        %1381 = vmatpush1.msra.mxu0 %v1380
        %1382 = vmatprep.subr.mxu0 0.0
        %v1383 = vand.u32 %v232, 4294901760
        %1384 = vmatpush1.msra.mxu0 %v1383
        %1385 = vmatprep.subr.mxu0 0.0
        %v1386 = vand.u32 %v231, 4294901760
        %1387 = vmatpush1.msra.mxu0 %v1386
        %1388 = vmatprep.subr.mxu0 0.0
        %v1389 = vand.u32 %v230, 4294901760
        %1390 = vmatpush1.msra.mxu0 %v1389
        %1391 = vmatprep.subr.mxu0 0.0
        %v1392 = vand.u32 %v229, 4294901760
        %1393 = vmatpush1.msra.mxu0 %v1392
        %1394 = vmatprep.subr.mxu0 0.0
        %v1395 = vand.u32 %v228, 4294901760
        %1396 = vmatpush1.msra.mxu0 %v1395
        %1397 = vmatprep.subr.mxu0 0.0
        %v1398 = vand.u32 %v227, 4294901760
        %1399 = vmatpush1.msra.mxu0 %v1398
        %1400 = vmatprep.subr.mxu0 0.0
        %1401 = vmatpush2.msra.mxu0 0.0
        %1402 = vmatprep.subr.mxu0 0.0
        %1403 = vmatpush2.msra.mxu0 0.0
        %1404 = vmatprep.subr.mxu0 0.0
        %1405 = vmatpush2.msra.mxu0 0.0
        %1406 = vmatprep.subr.mxu0 0.0
        %1407 = vmatpush2.msra.mxu0 0.0
        %1408 = vmatprep.subr.mxu0 0.0
        %1409 = vmatpush2.msra.mxu0 0.0
        %1410 = vmatprep.subr.mxu0 0.0
        %1411 = vmatpush2.msra.mxu0 0.0
        %1412 = vmatprep.subr.mxu0 0.0
        %1413 = vmatpush2.msra.mxu0 0.0
        %1414 = vmatprep.subr.mxu0 0.0
        %1415 = vmatpush2.msra.mxu0 0.0
        %1416 = vmatprep.subr.mxu0 0.0
        %1417 = vmatpush2.msra.mxu0 0.0
        %1418 = vmatprep.subr.mxu0 0.0
        %1419 = vmatpush2.msra.mxu0 0.0
        %1420 = vmatprep.subr.mxu0 0.0
        %1421 = vmatpush2.msra.mxu0 0.0
        %1422 = vmatprep.subr.mxu0 0.0
        %1423 = vmatpush2.msra.mxu0 0.0
        %1424 = vmatprep.subr.mxu0 0.0
        %1425 = vmatpush2.msra.mxu0 0.0
        %1426 = vmatprep.subr.mxu0 0.0
        %1427 = vmatpush2.msra.mxu0 0.0
        %1428 = vmatprep.subr.mxu0 0.0
        %1429 = vmatpush2.msra.mxu0 0.0
        %1430 = vmatprep.subr.mxu0 0.0
        %1431 = vmatpush2.msra.mxu0 0.0
        %1432 = vmatprep.mubr.f32.mxu0 0.0
        %v1433 = vand.u32 %v211, 4294901760
        %1434 = vmatmul.mubr.f32.gmra.mxu0 %v1433
        %v1435 = vpop.f32.mrf.mxu0
        %v1436 = vadd.f32 %v1259, %v1435
        %v1437 = vpop.f32.mrf.mxu0
        %1438 = vmatprep.mubr.f32.mxu0 0.0
        %v1439 = vand.u32 %v212, 4294901760
        %1440 = vmatmul.mubr.f32.gmra.mxu0 %v1439
        %v1441 = vpop.f32.mrf.mxu0
        %v1442 = vadd.f32 %v1265, %v1441
        %v1443 = vpop.f32.mrf.mxu0
        %1444 = vmatprep.mubr.f32.mxu0 0.0
        %v1445 = vand.u32 %v213, 4294901760
        %1446 = vmatmul.mubr.f32.gmra.mxu0 %v1445
        %v1447 = vpop.f32.mrf.mxu0
        %v1448 = vadd.f32 %v1271, %v1447
        %v1449 = vpop.f32.mrf.mxu0
        %1450 = vmatprep.mubr.f32.mxu0 0.0
        %v1451 = vand.u32 %v214, 4294901760
        %1452 = vmatmul.mubr.f32.gmra.mxu0 %v1451
        %v1453 = vpop.f32.mrf.mxu0
        %v1454 = vadd.f32 %v1277, %v1453
        %v1455 = vpop.f32.mrf.mxu0
        %1456 = vmatprep.mubr.f32.mxu0 0.0
        %v1457 = vand.u32 %v215, 4294901760
        %1458 = vmatmul.mubr.f32.gmra.mxu0 %v1457
        %v1459 = vpop.f32.mrf.mxu0
        %v1460 = vadd.f32 %v1283, %v1459
        %v1461 = vpop.f32.mrf.mxu0
        %1462 = vmatprep.mubr.f32.mxu0 0.0
        %v1463 = vand.u32 %v216, 4294901760
        %1464 = vmatmul.mubr.f32.gmra.mxu0 %v1463
        %v1465 = vpop.f32.mrf.mxu0
        %v1466 = vadd.f32 %v1289, %v1465
        %v1467 = vpop.f32.mrf.mxu0
        %1468 = vmatprep.mubr.f32.mxu0 0.0
        %v1469 = vand.u32 %v217, 4294901760
        %1470 = vmatmul.mubr.f32.gmra.mxu0 %v1469
        %v1471 = vpop.f32.mrf.mxu0
        %v1472 = vadd.f32 %v1295, %v1471
        %v1473 = vpop.f32.mrf.mxu0
        %1474 = vmatprep.mubr.f32.mxu0 0.0
        %v1475 = vand.u32 %v218, 4294901760
        %1476 = vmatmul.mubr.f32.gmra.mxu0 %v1475
        %v1477 = vpop.f32.mrf.mxu0
        %v1478 = vadd.f32 %v1301, %v1477
        %v1479 = vpop.f32.mrf.mxu0
        %1480 = vmatprep.mubr.f32.mxu0 0.0
        %v1481 = vand.u32 %v219, 4294901760
        %1482 = vmatmul.mubr.f32.gmra.mxu0 %v1481
        %v1483 = vpop.f32.mrf.mxu0
        %v1484 = vadd.f32 %v1307, %v1483
        %v1485 = vpop.f32.mrf.mxu0
        %1486 = vmatprep.mubr.f32.mxu0 0.0
        %v1487 = vand.u32 %v220, 4294901760
        %1488 = vmatmul.mubr.f32.gmra.mxu0 %v1487
        %v1489 = vpop.f32.mrf.mxu0
        %v1490 = vadd.f32 %v1313, %v1489
        %v1491 = vpop.f32.mrf.mxu0
        %1492 = vmatprep.mubr.f32.mxu0 0.0
        %v1493 = vand.u32 %v221, 4294901760
        %1494 = vmatmul.mubr.f32.gmra.mxu0 %v1493
        %v1495 = vpop.f32.mrf.mxu0
        %v1496 = vadd.f32 %v1319, %v1495
        %v1497 = vpop.f32.mrf.mxu0
        %1498 = vmatprep.mubr.f32.mxu0 0.0
        %v1499 = vand.u32 %v222, 4294901760
        %1500 = vmatmul.mubr.f32.gmra.mxu0 %v1499
        %v1501 = vpop.f32.mrf.mxu0
        %v1502 = vadd.f32 %v1325, %v1501
        %v1503 = vpop.f32.mrf.mxu0
        %1504 = vmatprep.mubr.f32.mxu0 0.0
        %v1505 = vand.u32 %v223, 4294901760
        %1506 = vmatmul.mubr.f32.gmra.mxu0 %v1505
        %v1507 = vpop.f32.mrf.mxu0
        %v1508 = vadd.f32 %v1331, %v1507
        %v1509 = vpop.f32.mrf.mxu0
        %1510 = vmatprep.mubr.f32.mxu0 0.0
        %v1511 = vand.u32 %v224, 4294901760
        %1512 = vmatmul.mubr.f32.gmra.mxu0 %v1511
        %v1513 = vpop.f32.mrf.mxu0
        %v1514 = vadd.f32 %v1337, %v1513
        %v1515 = vpop.f32.mrf.mxu0
        %1516 = vmatprep.mubr.f32.mxu0 0.0
        %v1517 = vand.u32 %v225, 4294901760
        %1518 = vmatmul.mubr.f32.gmra.mxu0 %v1517
        %v1519 = vpop.f32.mrf.mxu0
        %v1520 = vadd.f32 %v1343, %v1519
        %v1521 = vpop.f32.mrf.mxu0
        %1522 = vmatprep.mubr.f32.mxu0 0.0
        %v1523 = vand.u32 %v226, 4294901760
        %1524 = vmatmul.mubr.f32.gmra.mxu0 %v1523
        %v1525 = vpop.f32.mrf.mxu0
        %v1526 = vadd.f32 %v1349, %v1525
        %v1527 = vpop.f32.mrf.mxu0
        %1528 = vdwg.mxu0
        %v1529 = vstv %s210
        %v1530 = vmul.f32 %v1529, %v1436
        %v1531 = vmul.f32 %v1529, %v1442
        %v1532 = vmul.f32 %v1529, %v1448
        %v1533 = vmul.f32 %v1529, %v1454
        %v1534 = vmul.f32 %v1529, %v1460
        %v1535 = vmul.f32 %v1529, %v1466
        %v1536 = vmul.f32 %v1529, %v1472
        %v1537 = vmul.f32 %v1529, %v1478
        %v1538 = vmul.f32 %v1529, %v1484
        %v1539 = vmul.f32 %v1529, %v1490
        %v1540 = vmul.f32 %v1529, %v1496
        %v1541 = vmul.f32 %v1529, %v1502
        %v1542 = vmul.f32 %v1529, %v1508
        %v1543 = vmul.f32 %v1529, %v1514
        %v1544 = vmul.f32 %v1529, %v1520
        %v1545 = vmul.f32 %v1529, %v1526
        %1546 = vst [vmem:[%s204] sm:$0xff] %v1530
        %1547 = vst [vmem:[%s204 + $0x8] sm:$0xff] %v1531
        %1548 = vst [vmem:[%s204 + $0x10] sm:$0xff] %v1532
        %1549 = vst [vmem:[%s204 + $0x18] sm:$0xff] %v1533
        %1550 = vst [vmem:[%s204 + $0x20] sm:$0xff] %v1534
        %1551 = vst [vmem:[%s204 + $0x28] sm:$0xff] %v1535
        %1552 = vst [vmem:[%s204 + $0x30] sm:$0xff] %v1536
        %1553 = vst [vmem:[%s204 + $0x38] sm:$0xff] %v1537
        %1554 = vst [vmem:[%s204 + $0x40] sm:$0xff] %v1538
        %1555 = vst [vmem:[%s204 + $0x48] sm:$0xff] %v1539
        %1556 = vst [vmem:[%s204 + $0x50] sm:$0xff] %v1540
        %1557 = vst [vmem:[%s204 + $0x58] sm:$0xff] %v1541
        %1558 = vst [vmem:[%s204 + $0x60] sm:$0xff] %v1542
        %1559 = vst [vmem:[%s204 + $0x68] sm:$0xff] %v1543
        %1560 = vst [vmem:[%s204 + $0x70] sm:$0xff] %v1544
        %1561 = vst [vmem:[%s204 + $0x78] sm:$0xff] %v1545
        %s1562 = sand.u32 %s98, 1
        %s1563 = scalar_lea.sflag [#allocation5], %s1562
        %s1564 = sand.u32 %s98, 1
        %s1565 = smul.addr %s1564, 128
        %s1566 = scalar_lea.vmem [#allocation8], %s1565
        // Predicated region
        $region41: #{tpu_custom_call.1} parent=31 // pred_check
          %p1567 = pneg %p108
        $region42: #{tpu_custom_call.1} parent=31 // pred_check_branch
          %1569 = sbr.rel (%p1567) target = $region44
        $region43: #{tpu_custom_call.1} parent=31 // pred_region
          %s1570 = smul.u32 16, %s22
          %s1572 = ssub.s32 2048, 2048
          %1573 = vsyncadd %s1563, %s1572
          %s1574 = smul.addr %s1570, 128
          %s1575 = scalar_lea.hbm %s3, %s1574
          %s1576 = sshll.u32 %s1566, 4
          %s1577 = int_to_ptr.vmem [resolvable:$true] %s1576
          %1582 = dma.vmem_to_hbm [thread:$0]  %s1577, 2048, %s1575, %s1563, 128, 128, 8
        $region44: #{tpu_custom_call.1} parent=31 // pred_fallthru
          _
      $region32: #{tpu_custom_call.1} parent=5 // pred_fallthru
        _
      %p1583 = scmp.le.s32.totalorder 2, %s17
      // Predicated region
      $region45: #{tpu_custom_call.1} parent=5 // pred_check
        %p1584 = pneg %p1583
      $region46: #{tpu_custom_call.1} parent=5 // pred_check_branch
        %1586 = sbr.rel (%p1584) target = $region48
      $region47: #{tpu_custom_call.1} parent=5 // pred_region
        %s1587 = ssub.s32 %s17, 2
        // Predicated region
        $region49: #{tpu_custom_call.1} parent=47 // pred_check
          %p1588 = pneg %p114
        $region50: #{tpu_custom_call.1} parent=47 // pred_check_branch
          %1590 = sbr.rel (%p1588) target = $region52
        $region51: #{tpu_custom_call.1} parent=47 // pred_region
          %s1591 = sand.u32 %s99, 1
          %s1592 = scalar_lea.sflag [#allocation5], %s1591
          %s1593 = sand.u32 %s99, 1
          %s1594 = smul.addr %s1593, 128
          %s1595 = scalar_lea.vmem [#allocation8], %s1594
          %1596 = dma.done %s1592, 2048
        $region52: #{tpu_custom_call.1} parent=47 // pred_fallthru
          _
      $region48: #{tpu_custom_call.1} parent=5 // pred_fallthru
        _
    $region6: #{tpu_custom_call.1} parent=1 // loop_footer
      %s21 = sadd.s32 1, %s17
    $region7: #{tpu_custom_call.1} parent=1 // loop_footer_branch
      %16 = sbr.rel target = $region3
    $region8: #{tpu_custom_call.1} parent=1 // loop_exit
      _
    %1597 = vsyncpa [#allocation4], 1
    %s1598 = scalar_lea.sflag [#allocation4], 1
    %1599 = vsyncpa %s1598, 1
    %1600 = vsyncpa [#allocation7], 1
    %1601 = vsyncpa [#allocation5], 1
    %s1602 = scalar_lea.sflag [#allocation5], 1
    %1603 = vsyncpa %s1602, 1

</llo_original>
